<compile_context>
chip_gen: v6e
topology: v6e:2x2x1
jax: 0.10.0
libtpu: 0.0.40
codegen_flags: <defaults>
</compile_context>

<pallas_src>
from functools import partial

import jax
import jax.numpy as jnp
from jax import lax
from jax.experimental import pallas as pl
from jax.experimental.pallas import tpu as pltpu

LN_EPS = 1e-5


def _round_up(n, m):
    return ((n + m - 1) // m) * m


def _pad_to(a, shape):
    pads = [(0, t - s) for s, t in zip(a.shape, shape)]
    return jnp.pad(a, pads)


def _hgnn_kernel(x_ref, hl_ref, htr_ref, invd_ref, wb_ref,
                 th1_ref, b1_ref, g_ref, beta_ref,
                 th2_ref, b2_ref, o_ref,
                 *, hidden_dim, agg_first_1, agg_first_2):
    x = x_ref[...]                      # f32  [Np, Fp]   (kept f32 for residual)
    hl = hl_ref[...]                    # bf16 [Np, Ep]   exact 0/1 incidence H
    htr = htr_ref[...]                  # bf16 [Ep, Np]   exact 0/1 incidence H^T
    inv_d = invd_ref[...]               # f32  [Np, 1]    D^{-1}
    w_b = wb_ref[...]                   # f32  [Ep, 1]    W B^{-1}

    def hconv(xin_f32, theta_bf16, bias_f32, aggregate_first):
        # out = D^{-1} H (W B^{-1}) H^T X Theta + bias
        # Diagonal scalings are f32 broadcast multiplies on the intermediates;
        # all three contractions are bf16 MXU matmuls with f32 accumulation.
        if aggregate_first:
            # Aggregate nodes -> hyperedges first (cheaper when Fin <= Fout).
            m = jnp.dot(htr, xin_f32.astype(jnp.bfloat16),
                        preferred_element_type=jnp.float32)        # [Ep, Fin]
            m = m * w_b
            y = jnp.dot(m.astype(jnp.bfloat16), theta_bf16,
                        preferred_element_type=jnp.float32)        # [Ep, Fout]
        else:
            # Project first (cheaper when Fout <= Fin).
            xt = jnp.dot(xin_f32.astype(jnp.bfloat16), theta_bf16,
                         preferred_element_type=jnp.float32)       # [Np, Fout]
            y = jnp.dot(htr, xt.astype(jnp.bfloat16),
                        preferred_element_type=jnp.float32)        # [Ep, Fout]
            y = y * w_b
        out = jnp.dot(hl, y.astype(jnp.bfloat16),
                      preferred_element_type=jnp.float32)          # [Np, Fout]
        return out * inv_d + bias_f32

    # conv1 + relu (f32, VPU)
    h1 = hconv(x, th1_ref[...], b1_ref[...], agg_first_1)
    h1 = jnp.maximum(h1, 0.0)

    # LayerNorm over the *real* hidden dim with a masked, centered variance.
    # Padded hidden columns of h1 are exactly zero (zero-padded Theta1/bias1);
    # the column mask keeps (h1 - mu) contributions from padded columns out of
    # the variance, and zero-padded gamma/beta keep padded columns exactly zero
    # through conv2.
    hd_p = h1.shape[-1]
    inv_h = 1.0 / float(hidden_dim)
    col_mask = (lax.broadcasted_iota(jnp.int32, (1, hd_p), 1)
                < hidden_dim).astype(jnp.float32)
    mu = jnp.sum(h1, axis=-1, keepdims=True) * inv_h
    d = (h1 - mu) * col_mask
    var = jnp.sum(d * d, axis=-1, keepdims=True) * inv_h
    h1n = d * lax.rsqrt(var + LN_EPS) * g_ref[...] + beta_ref[...]
    # TODO(synk): F.dropout(p=0.5) defaults to training=True in PyTorch; treated
    # as identity (inference / deterministic) here.

    # conv2 + residual
    h2 = hconv(h1n, th2_ref[...], b2_ref[...], agg_first_2)
    o_ref[...] = h2 + x


def hgnn_forward(x, edge_index, edge_attr, params, num_edges):
    """Build dense 0/1 incidence matrices + diagonal degree scalings, pad to
    lane-dense shapes, and invoke the single-block Pallas kernel."""
    n, f_in = x.shape
    e = num_edges
    th1, b1, gamma, beta, th2, b2 = params
    hid = th1.shape[1]
    f_out = th2.shape[1]
    assert f_out == f_in, "residual x2 + data.x requires output_dim == input_dim"

    # N is both a lane (last) dim of h_rightT and the contraction dim of the
    # hyperedge aggregation matmul -> pad to 128 for dense vld/vst + full MXU.
    n_p = _round_up(n, 128)
    e_p = _round_up(e, 128)
    fi_p = _round_up(f_in, 128)
    hd_p = _round_up(hid, 128)
    fo_p = _round_up(f_out, 128)

    # Dense incidence H [N, E] from COO edge_index (node_idx, hyperedge_idx).
    H = jnp.zeros((n, e), jnp.float32).at[edge_index[0], edge_index[1]].set(1.0)
    w = edge_attr.astype(jnp.float32).reshape(1, e)

    # Degrees exactly as torch_geometric HypergraphConv computes them.
    # NOTE: guards only exactly-zero degrees (same as the reference).
    deg_v = jnp.sum(H * w, axis=1, keepdims=True)          # [N, 1]  D
    deg_e = jnp.sum(H, axis=0, keepdims=True)              # [1, E]  B
    inv_D = jnp.where(deg_v > 0, 1.0 / deg_v, 0.0)                         # [N,1]
    wB = jnp.where(deg_e > 0, w / deg_e, 0.0).reshape(e, 1)                # [E,1]

    # Exact 0/1 bf16 incidence masks (lossless in bf16); diagonal scalings stay
    # f32 and are applied in-kernel.
    h_left = _pad_to(H, (n_p, e_p)).astype(jnp.bfloat16)                   # H
    h_rightT = _pad_to(H.T, (e_p, n_p)).astype(jnp.bfloat16)               # H^T
    inv_D_p = _pad_to(inv_D, (n_p, 1))
    wB_p = _pad_to(wB, (e_p, 1))

    x_p = _pad_to(x.astype(jnp.float32), (n_p, fi_p))                      # f32 for residual
    th1_p = _pad_to(th1.astype(jnp.float32), (fi_p, hd_p)).astype(jnp.bfloat16)
    th2_p = _pad_to(th2.astype(jnp.float32), (hd_p, fo_p)).astype(jnp.bfloat16)
    b1_p = _pad_to(b1.reshape(1, -1).astype(jnp.float32), (1, hd_p))
    g_p = _pad_to(gamma.reshape(1, -1).astype(jnp.float32), (1, hd_p))     # padded gamma = 0
    beta_p = _pad_to(beta.reshape(1, -1).astype(jnp.float32), (1, hd_p))   # padded beta  = 0
    b2_p = _pad_to(b2.reshape(1, -1).astype(jnp.float32), (1, fo_p))

    # Per-conv matmul ordering: the dominant FLOP term is E*N*width where width
    # is whichever of (input, output) dim sits on the E*N contraction. Put the
    # smaller one there.
    agg_first_1 = fi_p <= hd_p     # conv1: input f_in, output hidden
    agg_first_2 = hd_p <= fo_p     # conv2: input hidden, output f_out

    args = (x_p, h_left, h_rightT, inv_D_p, wB_p,
            th1_p, b1_p, g_p, beta_p, th2_p, b2_p)

    # --- Advisory cost / VMEM sizing (shapes are static Python ints). ---
    def conv_flops(fin, fout, agg):
        if agg:
            return 2 * (e_p * n_p * fin + e_p * fin * fout + n_p * e_p * fout)
        return 2 * (n_p * fin * fout + e_p * n_p * fout + n_p * e_p * fout)

    flops = conv_flops(fi_p, hd_p, agg_first_1) + conv_flops(hd_p, fo_p, agg_first_2)
    io_bytes = sum(a.size * a.dtype.itemsize for a in args) + n_p * fo_p * 4
    max_w = max(fi_p, hd_p, fo_p)
    # f32 intermediates (xt/m, y, out, h1, d/h1n, h2) + bf16 cast temporaries.
    interm_bytes = (5 * n_p + 3 * e_p) * max_w * 4
    vmem_needed = io_bytes + interm_bytes + (4 << 20)

    try:
        phys = int(pltpu.get_tpu_info().vmem_capacity_bytes)
    except Exception:
        phys = 64 << 20
    # Leave compiler-scratch headroom: ~48 MiB usable on v7x (64 MiB physical),
    # ~102 MiB on v5e/v6e (128 MiB physical).
    vmem_cap = min(int(phys * 0.8), phys - (16 << 20))
    vmem_limit = int(min(vmem_cap, max(32 << 20, vmem_needed)))

    vmem = pl.BlockSpec(memory_space=pltpu.MemorySpace.VMEM)
    out = pl.pallas_call(
        partial(_hgnn_kernel, hidden_dim=hid,
                agg_first_1=agg_first_1, agg_first_2=agg_first_2),
        out_shape=jax.ShapeDtypeStruct((n_p, fo_p), jnp.float32),
        in_specs=[vmem] * len(args),
        out_specs=vmem,
        compiler_params=pltpu.CompilerParams(vmem_limit_bytes=vmem_limit),
        cost_estimate=pl.CostEstimate(
            flops=int(flops), transcendentals=int(n_p),
            bytes_accessed=int(io_bytes)),
    )(*args)
    return out[:n, :f_out]


def _glorot(key, shape):
    fan_in, fan_out = shape
    limit = (6.0 / (fan_in + fan_out)) ** 0.5
    return jax.random.uniform(key, shape, jnp.float32, -limit, limit)


if __name__ == "__main__":
    # Small shapes: 8 nodes, 6 hyperedges, input=output=32 (residual requires it),
    # hidden=32.
    N, E, IN_DIM, HID_DIM, OUT_DIM = 8, 6, 32, 32, 32

    key = jax.random.PRNGKey(0)
    k_x, k_w, k_t1, k_t2 = jax.random.split(key, 4)

    x = jax.random.normal(k_x, (N, IN_DIM), jnp.float32)
    # Hypergraph incidence as COO pairs (node_idx, hyperedge_idx).
    edge_index = jnp.array(
        [[0, 1, 2, 1, 2, 3, 3, 4, 4, 5, 6, 5, 6, 7, 0, 7],
         [0, 0, 0, 1, 1, 1, 2, 2, 3, 3, 3, 4, 4, 4, 5, 5]], dtype=jnp.int32)
    edge_attr = jax.random.uniform(k_w, (E,), jnp.float32, 0.5, 1.5)

    params = (
        _glorot(k_t1, (IN_DIM, HID_DIM)),      # conv1 weight (Theta1)
        jnp.zeros((HID_DIM,), jnp.float32),    # conv1 bias
        jnp.ones((HID_DIM,), jnp.float32),     # LayerNorm gamma
        jnp.zeros((HID_DIM,), jnp.float32),    # LayerNorm beta
        _glorot(k_t2, (HID_DIM, OUT_DIM)),     # conv2 weight (Theta2)
        jnp.zeros((OUT_DIM,), jnp.float32),    # conv2 bias
    )

    fwd = jax.jit(hgnn_forward, static_argnames=("num_edges",))
    out = fwd(x, edge_index, edge_attr, params, num_edges=E)
    jax.block_until_ready(out)
    assert out.shape == (N, OUT_DIM) and out.dtype == jnp.float32
    assert bool(jnp.all(jnp.isfinite(out)))
    print("KERNEL_OK")
</pallas_src>

<mosaic_0001>
module attributes {stable_mosaic.version = 11 : i64} {
  func.func @_hgnn_kernel(%arg0: memref<128x128xf32, #tpu.memory_space<vmem>>, %arg1: memref<128x128xbf16, #tpu.memory_space<vmem>>, %arg2: memref<128x128xbf16, #tpu.memory_space<vmem>>, %arg3: memref<128x1xf32, #tpu.memory_space<vmem>>, %arg4: memref<128x1xf32, #tpu.memory_space<vmem>>, %arg5: memref<128x128xbf16, #tpu.memory_space<vmem>>, %arg6: memref<1x128xf32, #tpu.memory_space<vmem>>, %arg7: memref<1x128xf32, #tpu.memory_space<vmem>>, %arg8: memref<1x128xf32, #tpu.memory_space<vmem>>, %arg9: memref<128x128xbf16, #tpu.memory_space<vmem>>, %arg10: memref<1x128xf32, #tpu.memory_space<vmem>>, %arg11: memref<128x128xf32, #tpu.memory_space<vmem>>) attributes {dimension_semantics = [], scalar_prefetch = 0 : i64, scratch_operands = 0 : i64, tpu.core_type = #tpu.core_type<tc>} {
    %c0 = arith.constant 0 : index
    %c0_0 = arith.constant 0 : index
    %0 = vector.load %arg0[%c0, %c0_0] : memref<128x128xf32, #tpu.memory_space<vmem>>, vector<128x128xf32>
    %c0_1 = arith.constant 0 : index
    %c0_2 = arith.constant 0 : index
    %1 = vector.load %arg1[%c0_1, %c0_2] : memref<128x128xbf16, #tpu.memory_space<vmem>>, vector<128x128xbf16>
    %c0_3 = arith.constant 0 : index
    %c0_4 = arith.constant 0 : index
    %2 = vector.load %arg2[%c0_3, %c0_4] : memref<128x128xbf16, #tpu.memory_space<vmem>>, vector<128x128xbf16>
    %c0_5 = arith.constant 0 : index
    %c0_6 = arith.constant 0 : index
    %3 = vector.load %arg3[%c0_5, %c0_6] : memref<128x1xf32, #tpu.memory_space<vmem>>, vector<128x1xf32>
    %c0_7 = arith.constant 0 : index
    %c0_8 = arith.constant 0 : index
    %4 = vector.load %arg4[%c0_7, %c0_8] : memref<128x1xf32, #tpu.memory_space<vmem>>, vector<128x1xf32>
    %c0_9 = arith.constant 0 : index
    %c0_10 = arith.constant 0 : index
    %5 = vector.load %arg5[%c0_9, %c0_10] : memref<128x128xbf16, #tpu.memory_space<vmem>>, vector<128x128xbf16>
    %c0_11 = arith.constant 0 : index
    %c0_12 = arith.constant 0 : index
    %6 = vector.load %arg6[%c0_11, %c0_12] : memref<1x128xf32, #tpu.memory_space<vmem>>, vector<1x128xf32>
    %7 = arith.truncf %0 : vector<128x128xf32> to vector<128x128xbf16>
    %cst = arith.constant dense<0.000000e+00> : vector<128x128xf32>
    %8 = tpu.matmul %2, %7, %cst {dimension_numbers = #tpu.dot_dimension_numbers<[1], [0], [0], [1], [0, 0, 1, 1], [], []>} : vector<128x128xbf16>, vector<128x128xbf16>, vector<128x128xf32> -> vector<128x128xf32>
    %9 = vector.broadcast %4 : vector<128x1xf32> to vector<128x128xf32>
    %10 = arith.mulf %8, %9 : vector<128x128xf32>
    %11 = arith.truncf %10 : vector<128x128xf32> to vector<128x128xbf16>
    %cst_13 = arith.constant dense<0.000000e+00> : vector<128x128xf32>
    %12 = tpu.matmul %11, %5, %cst_13 {dimension_numbers = #tpu.dot_dimension_numbers<[1], [0], [0], [1], [0, 0, 1, 1], [], []>} : vector<128x128xbf16>, vector<128x128xbf16>, vector<128x128xf32> -> vector<128x128xf32>
    %13 = arith.truncf %12 : vector<128x128xf32> to vector<128x128xbf16>
    %cst_14 = arith.constant dense<0.000000e+00> : vector<128x128xf32>
    %14 = tpu.matmul %1, %13, %cst_14 {dimension_numbers = #tpu.dot_dimension_numbers<[1], [0], [0], [1], [0, 0, 1, 1], [], []>} : vector<128x128xbf16>, vector<128x128xbf16>, vector<128x128xf32> -> vector<128x128xf32>
    %15 = vector.broadcast %3 : vector<128x1xf32> to vector<128x128xf32>
    %16 = arith.mulf %14, %15 : vector<128x128xf32>
    %17 = vector.broadcast %6 : vector<1x128xf32> to vector<128x128xf32>
    %18 = arith.addf %16, %17 : vector<128x128xf32>
    %cst_15 = arith.constant 0.000000e+00 : f32
    %19 = vector.broadcast %cst_15 : f32 to vector<128x128xf32>
    %20 = arith.maximumf %18, %19 : vector<128x128xf32>
    %21 = tpu.iota {dimensions = array<i32: 1>} : vector<1x128xi32>
    %c32_i32 = arith.constant 32 : i32
    %22 = vector.broadcast %c32_i32 : i32 to vector<1x128xi32>
    %23 = arith.cmpi slt, %21, %22 : vector<1x128xi32>
    %24 = arith.extui %23 : vector<1x128xi1> to vector<1x128xi32>
    %25 = arith.sitofp %24 : vector<1x128xi32> to vector<1x128xf32>
    %cst_16 = arith.constant dense<0.000000e+00> : vector<128xf32>
    %26 = vector.multi_reduction <add>, %20, %cst_16 [1] : vector<128x128xf32> to vector<128xf32>
    %27 = vector.shape_cast %26 : vector<128xf32> to vector<128x1xf32>
    %cst_17 = arith.constant 3.125000e-02 : f32
    %28 = vector.broadcast %cst_17 : f32 to vector<128x1xf32>
    %29 = arith.mulf %27, %28 : vector<128x1xf32>
    %30 = vector.broadcast %29 : vector<128x1xf32> to vector<128x128xf32>
    %31 = arith.subf %20, %30 : vector<128x128xf32>
    %32 = vector.broadcast %25 : vector<1x128xf32> to vector<128x128xf32>
    %33 = arith.mulf %31, %32 : vector<128x128xf32>
    %34 = arith.mulf %33, %33 : vector<128x128xf32>
    %cst_18 = arith.constant dense<0.000000e+00> : vector<128xf32>
    %35 = vector.multi_reduction <add>, %34, %cst_18 [1] : vector<128x128xf32> to vector<128xf32>
    %36 = vector.shape_cast %35 : vector<128xf32> to vector<128x1xf32>
    %cst_19 = arith.constant 3.125000e-02 : f32
    %37 = vector.broadcast %cst_19 : f32 to vector<128x1xf32>
    %38 = arith.mulf %36, %37 : vector<128x1xf32>
    %cst_20 = arith.constant 9.99999974E-6 : f32
    %39 = vector.broadcast %cst_20 : f32 to vector<128x1xf32>
    %40 = arith.addf %38, %39 : vector<128x1xf32>
    %41 = math.rsqrt %40 : vector<128x1xf32>
    %42 = vector.broadcast %41 : vector<128x1xf32> to vector<128x128xf32>
    %43 = arith.mulf %33, %42 : vector<128x128xf32>
    %c0_21 = arith.constant 0 : index
    %c0_22 = arith.constant 0 : index
    %44 = vector.load %arg7[%c0_21, %c0_22] : memref<1x128xf32, #tpu.memory_space<vmem>>, vector<1x128xf32>
    %45 = vector.broadcast %44 : vector<1x128xf32> to vector<128x128xf32>
    %46 = arith.mulf %43, %45 : vector<128x128xf32>
    %c0_23 = arith.constant 0 : index
    %c0_24 = arith.constant 0 : index
    %47 = vector.load %arg8[%c0_23, %c0_24] : memref<1x128xf32, #tpu.memory_space<vmem>>, vector<1x128xf32>
    %48 = vector.broadcast %47 : vector<1x128xf32> to vector<128x128xf32>
    %49 = arith.addf %46, %48 : vector<128x128xf32>
    %c0_25 = arith.constant 0 : index
    %c0_26 = arith.constant 0 : index
    %50 = vector.load %arg9[%c0_25, %c0_26] : memref<128x128xbf16, #tpu.memory_space<vmem>>, vector<128x128xbf16>
    %c0_27 = arith.constant 0 : index
    %c0_28 = arith.constant 0 : index
    %51 = vector.load %arg10[%c0_27, %c0_28] : memref<1x128xf32, #tpu.memory_space<vmem>>, vector<1x128xf32>
    %52 = arith.truncf %49 : vector<128x128xf32> to vector<128x128xbf16>
    %cst_29 = arith.constant dense<0.000000e+00> : vector<128x128xf32>
    %53 = tpu.matmul %2, %52, %cst_29 {dimension_numbers = #tpu.dot_dimension_numbers<[1], [0], [0], [1], [0, 0, 1, 1], [], []>} : vector<128x128xbf16>, vector<128x128xbf16>, vector<128x128xf32> -> vector<128x128xf32>
    %54 = vector.broadcast %4 : vector<128x1xf32> to vector<128x128xf32>
    %55 = arith.mulf %53, %54 : vector<128x128xf32>
    %56 = arith.truncf %55 : vector<128x128xf32> to vector<128x128xbf16>
    %cst_30 = arith.constant dense<0.000000e+00> : vector<128x128xf32>
    %57 = tpu.matmul %56, %50, %cst_30 {dimension_numbers = #tpu.dot_dimension_numbers<[1], [0], [0], [1], [0, 0, 1, 1], [], []>} : vector<128x128xbf16>, vector<128x128xbf16>, vector<128x128xf32> -> vector<128x128xf32>
    %58 = arith.truncf %57 : vector<128x128xf32> to vector<128x128xbf16>
    %cst_31 = arith.constant dense<0.000000e+00> : vector<128x128xf32>
    %59 = tpu.matmul %1, %58, %cst_31 {dimension_numbers = #tpu.dot_dimension_numbers<[1], [0], [0], [1], [0, 0, 1, 1], [], []>} : vector<128x128xbf16>, vector<128x128xbf16>, vector<128x128xf32> -> vector<128x128xf32>
    %60 = vector.broadcast %3 : vector<128x1xf32> to vector<128x128xf32>
    %61 = arith.mulf %59, %60 : vector<128x128xf32>
    %62 = vector.broadcast %51 : vector<1x128xf32> to vector<128x128xf32>
    %63 = arith.addf %61, %62 : vector<128x128xf32>
    %64 = arith.addf %63, %0 : vector<128x128xf32>
    %c0_32 = arith.constant 0 : index
    %c0_33 = arith.constant 0 : index
    %65 = vector.load %arg11[%c0_32, %c0_33] : memref<128x128xf32, #tpu.memory_space<vmem>>, vector<128x128xf32>
    tpu.vector_store %arg11[%c0_32, %c0_33], %64 {strides = array<i32>} : memref<128x128xf32, #tpu.memory_space<vmem>>, vector<128x128xf32>,
    return
  }
}

</mosaic_0001>

<llo_original>
// kernel: hgnn_forward.1
$region0: #{hgnn_forward.1}
  #allocation0 [shape = 'u32[]', space=smem, size = 0x4, offset = 0x4, fixed_abs, tag = 'smem constant byte address 0x4 - core index']
  #allocation1 [shape = 'u32[144,128]{1,0:T(1,128)}', space=vmem, size = 0x12000, scoped, tag = 'internal scratch']
  %s0 = inlined_call_operand.vmem [shape: f32[128,128], index: 0, kind: input, shape index: {}]
  %s1 = inlined_call_operand.vmem [shape: bf16[128,128], index: 1, kind: input, shape index: {}]
  %s2 = inlined_call_operand.vmem [shape: bf16[128,128], index: 2, kind: input, shape index: {}]
  %s3 = inlined_call_operand.vmem [shape: f32[128,1], index: 3, kind: input, shape index: {}]
  %s4 = inlined_call_operand.vmem [shape: f32[128,1], index: 4, kind: input, shape index: {}]
  %s5 = inlined_call_operand.vmem [shape: bf16[128,128], index: 5, kind: input, shape index: {}]
  %s6 = inlined_call_operand.vmem [shape: f32[1,128], index: 6, kind: input, shape index: {}]
  %s7 = inlined_call_operand.vmem [shape: f32[1,128], index: 7, kind: input, shape index: {}]
  %s8 = inlined_call_operand.vmem [shape: f32[1,128], index: 8, kind: input, shape index: {}]
  %s9 = inlined_call_operand.vmem [shape: bf16[128,128], index: 9, kind: input, shape index: {}]
  %s10 = inlined_call_operand.vmem [shape: f32[1,128], index: 10, kind: input, shape index: {}]
  %s11 = inlined_call_operand.vmem [shape: f32[128,128], index: 11, kind: output, shape index: {}]
  %s12 = sld [smem:[#allocation0]]
  $region54: #{hgnn_forward.1} parent=0
    _
  %s14 = ssub.s32 1, %s12
  %s15 = scalar_select 0, %s14, %s12
  // Predicated region
  $region2: #{hgnn_forward.1} parent=0 // pred_check
    _
  $region3: #{hgnn_forward.1} parent=0 // pred_check_branch
    %17 = sbr.rel (0) target = $region5
  $region4: #{hgnn_forward.1} parent=0 // pred_region
    _
  $region5: #{hgnn_forward.1} parent=0 // pred_fallthru
    _
  // Predicated region
  $region6: #{hgnn_forward.1} parent=0 // pred_check
    _
  $region7: #{hgnn_forward.1} parent=0 // pred_check_branch
    %19 = sbr.rel (0) target = $region9
  $region8: #{hgnn_forward.1} parent=0 // pred_region
    _
  $region9: #{hgnn_forward.1} parent=0 // pred_fallthru
    _
  // Predicated region
  $region10: #{hgnn_forward.1} parent=0 // pred_check
    _
  $region11: #{hgnn_forward.1} parent=0 // pred_check_branch
    %21 = sbr.rel (0) target = $region13
  $region12: #{hgnn_forward.1} parent=0 // pred_region
    _
  $region13: #{hgnn_forward.1} parent=0 // pred_fallthru
    _
  // Predicated region
  $region14: #{hgnn_forward.1} parent=0 // pred_check
    _
  $region15: #{hgnn_forward.1} parent=0 // pred_check_branch
    %23 = sbr.rel (0) target = $region17
  $region16: #{hgnn_forward.1} parent=0 // pred_region
    _
  $region17: #{hgnn_forward.1} parent=0 // pred_fallthru
    _
  // Predicated region
  $region18: #{hgnn_forward.1} parent=0 // pred_check
    _
  $region19: #{hgnn_forward.1} parent=0 // pred_check_branch
    %25 = sbr.rel (0) target = $region21
  $region20: #{hgnn_forward.1} parent=0 // pred_region
    _
  $region21: #{hgnn_forward.1} parent=0 // pred_fallthru
    _
  // Predicated region
  $region22: #{hgnn_forward.1} parent=0 // pred_check
    _
  $region23: #{hgnn_forward.1} parent=0 // pred_check_branch
    %27 = sbr.rel (0) target = $region25
  $region24: #{hgnn_forward.1} parent=0 // pred_region
    _
  $region25: #{hgnn_forward.1} parent=0 // pred_fallthru
    _
  // Predicated region
  $region26: #{hgnn_forward.1} parent=0 // pred_check
    _
  $region27: #{hgnn_forward.1} parent=0 // pred_check_branch
    %29 = sbr.rel (0) target = $region29
  $region28: #{hgnn_forward.1} parent=0 // pred_region
    _
  $region29: #{hgnn_forward.1} parent=0 // pred_fallthru
    _
  // Predicated region
  $region30: #{hgnn_forward.1} parent=0 // pred_check
    _
  $region31: #{hgnn_forward.1} parent=0 // pred_check_branch
    %31 = sbr.rel (0) target = $region33
  $region32: #{hgnn_forward.1} parent=0 // pred_region
    _
  $region33: #{hgnn_forward.1} parent=0 // pred_fallthru
    _
  // Predicated region
  $region34: #{hgnn_forward.1} parent=0 // pred_check
    _
  $region35: #{hgnn_forward.1} parent=0 // pred_check_branch
    %33 = sbr.rel (0) target = $region37
  $region36: #{hgnn_forward.1} parent=0 // pred_region
    _
  $region37: #{hgnn_forward.1} parent=0 // pred_fallthru
    _
  // Predicated region
  $region38: #{hgnn_forward.1} parent=0 // pred_check
    _
  $region39: #{hgnn_forward.1} parent=0 // pred_check_branch
    %35 = sbr.rel (0) target = $region41
  $region40: #{hgnn_forward.1} parent=0 // pred_region
    _
  $region41: #{hgnn_forward.1} parent=0 // pred_fallthru
    _
  // Predicated region
  $region42: #{hgnn_forward.1} parent=0 // pred_check
    _
  $region43: #{hgnn_forward.1} parent=0 // pred_check_branch
    %37 = sbr.rel (0) target = $region45
  $region44: #{hgnn_forward.1} parent=0 // pred_region
    _
  $region45: #{hgnn_forward.1} parent=0 // pred_fallthru
    _
  %v39 = vld [vmem:[%s0] sm:$0xff]
  %v40 = vld [vmem:[%s0 + $0x8] sm:$0xff]
  %v41 = vld [vmem:[%s0 + $0x10] sm:$0xff]
  %v42 = vld [vmem:[%s0 + $0x18] sm:$0xff]
  %v43 = vld [vmem:[%s0 + $0x20] sm:$0xff]
  %v44 = vld [vmem:[%s0 + $0x28] sm:$0xff]
  %v45 = vld [vmem:[%s0 + $0x30] sm:$0xff]
  %v46 = vld [vmem:[%s0 + $0x38] sm:$0xff]
  %v47 = vld [vmem:[%s0 + $0x40] sm:$0xff]
  %v48 = vld [vmem:[%s0 + $0x48] sm:$0xff]
  %v49 = vld [vmem:[%s0 + $0x50] sm:$0xff]
  %v50 = vld [vmem:[%s0 + $0x58] sm:$0xff]
  %v51 = vld [vmem:[%s0 + $0x60] sm:$0xff]
  %v52 = vld [vmem:[%s0 + $0x68] sm:$0xff]
  %v53 = vld [vmem:[%s0 + $0x70] sm:$0xff]
  %v54 = vld [vmem:[%s0 + $0x78] sm:$0xff]
  %v55 = vld [vmem:[%s1] sm:$0xf]
  %v56 = vld [vmem:[%s1 + $0x4] sm:$0xf]
  %v57 = vld [vmem:[%s1 + $0x8] sm:$0xf]
  %v58 = vld [vmem:[%s1 + $0xc] sm:$0xf]
  %v59 = vld [vmem:[%s1 + $0x10] sm:$0xf]
  %v60 = vld [vmem:[%s1 + $0x14] sm:$0xf]
  %v61 = vld [vmem:[%s1 + $0x18] sm:$0xf]
  %v62 = vld [vmem:[%s1 + $0x1c] sm:$0xf]
  %v63 = vld [vmem:[%s1 + $0x20] sm:$0xf]
  %v64 = vld [vmem:[%s1 + $0x24] sm:$0xf]
  %v65 = vld [vmem:[%s1 + $0x28] sm:$0xf]
  %v66 = vld [vmem:[%s1 + $0x2c] sm:$0xf]
  %v67 = vld [vmem:[%s1 + $0x30] sm:$0xf]
  %v68 = vld [vmem:[%s1 + $0x34] sm:$0xf]
  %v69 = vld [vmem:[%s1 + $0x38] sm:$0xf]
  %v70 = vld [vmem:[%s1 + $0x3c] sm:$0xf]
  %v71 = vld [vmem:[%s2] sm:$0xf]
  %v72 = vld [vmem:[%s2 + $0x4] sm:$0xf]
  %v73 = vld [vmem:[%s2 + $0x8] sm:$0xf]
  %v74 = vld [vmem:[%s2 + $0xc] sm:$0xf]
  %v75 = vld [vmem:[%s2 + $0x10] sm:$0xf]
  %v76 = vld [vmem:[%s2 + $0x14] sm:$0xf]
  %v77 = vld [vmem:[%s2 + $0x18] sm:$0xf]
  %v78 = vld [vmem:[%s2 + $0x1c] sm:$0xf]
  %v79 = vld [vmem:[%s2 + $0x20] sm:$0xf]
  %v80 = vld [vmem:[%s2 + $0x24] sm:$0xf]
  %v81 = vld [vmem:[%s2 + $0x28] sm:$0xf]
  %v82 = vld [vmem:[%s2 + $0x2c] sm:$0xf]
  %v83 = vld [vmem:[%s2 + $0x30] sm:$0xf]
  %v84 = vld [vmem:[%s2 + $0x34] sm:$0xf]
  %v85 = vld [vmem:[%s2 + $0x38] sm:$0xf]
  %v86 = vld [vmem:[%s2 + $0x3c] sm:$0xf]
  %v87 = vld [vmem:[%s3] sm:$0xff]
  %v88 = vld [vmem:[%s3 + $0x8] sm:$0xff]
  %v89 = vld [vmem:[%s3 + $0x10] sm:$0xff]
  %v90 = vld [vmem:[%s3 + $0x18] sm:$0xff]
  %v91 = vld [vmem:[%s3 + $0x20] sm:$0xff]
  %v92 = vld [vmem:[%s3 + $0x28] sm:$0xff]
  %v93 = vld [vmem:[%s3 + $0x30] sm:$0xff]
  %v94 = vld [vmem:[%s3 + $0x38] sm:$0xff]
  %v95 = vld [vmem:[%s3 + $0x40] sm:$0xff]
  %v96 = vld [vmem:[%s3 + $0x48] sm:$0xff]
  %v97 = vld [vmem:[%s3 + $0x50] sm:$0xff]
  %v98 = vld [vmem:[%s3 + $0x58] sm:$0xff]
  %v99 = vld [vmem:[%s3 + $0x60] sm:$0xff]
  %v100 = vld [vmem:[%s3 + $0x68] sm:$0xff]
  %v101 = vld [vmem:[%s3 + $0x70] sm:$0xff]
  %v102 = vld [vmem:[%s3 + $0x78] sm:$0xff]
  %v103 = vld [vmem:[%s4] sm:$0xff]
  %v104 = vld [vmem:[%s4 + $0x8] sm:$0xff]
  %v105 = vld [vmem:[%s4 + $0x10] sm:$0xff]
  %v106 = vld [vmem:[%s4 + $0x18] sm:$0xff]
  %v107 = vld [vmem:[%s4 + $0x20] sm:$0xff]
  %v108 = vld [vmem:[%s4 + $0x28] sm:$0xff]
  %v109 = vld [vmem:[%s4 + $0x30] sm:$0xff]
  %v110 = vld [vmem:[%s4 + $0x38] sm:$0xff]
  %v111 = vld [vmem:[%s4 + $0x40] sm:$0xff]
  %v112 = vld [vmem:[%s4 + $0x48] sm:$0xff]
  %v113 = vld [vmem:[%s4 + $0x50] sm:$0xff]
  %v114 = vld [vmem:[%s4 + $0x58] sm:$0xff]
  %v115 = vld [vmem:[%s4 + $0x60] sm:$0xff]
  %v116 = vld [vmem:[%s4 + $0x68] sm:$0xff]
  %v117 = vld [vmem:[%s4 + $0x70] sm:$0xff]
  %v118 = vld [vmem:[%s4 + $0x78] sm:$0xff]
  %v119 = vld [vmem:[%s5] sm:$0xf]
  %v120 = vld [vmem:[%s5 + $0x4] sm:$0xf]
  %v121 = vld [vmem:[%s5 + $0x8] sm:$0xf]
  %v122 = vld [vmem:[%s5 + $0xc] sm:$0xf]
  %v123 = vld [vmem:[%s5 + $0x10] sm:$0xf]
  %v124 = vld [vmem:[%s5 + $0x14] sm:$0xf]
  %v125 = vld [vmem:[%s5 + $0x18] sm:$0xf]
  %v126 = vld [vmem:[%s5 + $0x1c] sm:$0xf]
  %v127 = vld [vmem:[%s5 + $0x20] sm:$0xf]
  %v128 = vld [vmem:[%s5 + $0x24] sm:$0xf]
  %v129 = vld [vmem:[%s5 + $0x28] sm:$0xf]
  %v130 = vld [vmem:[%s5 + $0x2c] sm:$0xf]
  %v131 = vld [vmem:[%s5 + $0x30] sm:$0xf]
  %v132 = vld [vmem:[%s5 + $0x34] sm:$0xf]
  %v133 = vld [vmem:[%s5 + $0x38] sm:$0xf]
  %v134 = vld [vmem:[%s5 + $0x3c] sm:$0xf]
  %v135 = vld [vmem:[%s6] sm:$0x1]
  %v136 = vpack.c.bf16 %v40, %v39
  %v137 = vpack.c.bf16 %v42, %v41
  %v138 = vpack.c.bf16 %v44, %v43
  %v139 = vpack.c.bf16 %v46, %v45
  %v140 = vpack.c.bf16 %v48, %v47
  %v141 = vpack.c.bf16 %v50, %v49
  %v142 = vpack.c.bf16 %v52, %v51
  %v143 = vpack.c.bf16 %v54, %v53
  %v160 = vunpack.c.l.b16 %v71
  %v161 = vunpack.c.l.b16 %v72
  %v162 = vunpack.c.l.b16 %v73
  %v163 = vunpack.c.l.b16 %v74
  %v164 = vunpack.c.l.b16 %v75
  %v165 = vunpack.c.l.b16 %v76
  %v166 = vunpack.c.l.b16 %v77
  %v167 = vunpack.c.l.b16 %v78
  %v168 = vunpack.c.l.b16 %v79
  %v169 = vunpack.c.l.b16 %v80
  %v170 = vunpack.c.l.b16 %v81
  %v171 = vunpack.c.l.b16 %v82
  %v172 = vunpack.c.l.b16 %v83
  %v173 = vunpack.c.l.b16 %v84
  %v174 = vunpack.c.l.b16 %v85
  %v175 = vunpack.c.l.b16 %v86
  %v176 = vpack.c.b16 %v161, %v160
  %v177 = vpack.c.b16 %v163, %v162
  %v178 = vpack.c.b16 %v165, %v164
  %v179 = vpack.c.b16 %v167, %v166
  %v180 = vpack.c.b16 %v169, %v168
  %v181 = vpack.c.b16 %v171, %v170
  %v182 = vpack.c.b16 %v173, %v172
  %v183 = vpack.c.b16 %v175, %v174
  %192 = vmatprep.subr.bf16.mxu0 0
  %193 = vmatpush1.bf16.msra.mxu0 %v143
  %194 = vmatprep.subr.bf16.mxu0 0
  %195 = vmatpush1.bf16.msra.mxu0 %v142
  %196 = vmatprep.subr.bf16.mxu0 0
  %197 = vmatpush1.bf16.msra.mxu0 %v141
  %198 = vmatprep.subr.bf16.mxu0 0
  %199 = vmatpush1.bf16.msra.mxu0 %v140
  %200 = vmatprep.subr.bf16.mxu0 0
  %201 = vmatpush1.bf16.msra.mxu0 %v139
  %202 = vmatprep.subr.bf16.mxu0 0
  %203 = vmatpush1.bf16.msra.mxu0 %v138
  %204 = vmatprep.subr.bf16.mxu0 0
  %205 = vmatpush1.bf16.msra.mxu0 %v137
  %206 = vmatprep.subr.bf16.mxu0 0
  %207 = vmatpush1.bf16.msra.mxu0 %v136
  %208 = vmatprep.subr.bf16.mxu0 0
  %209 = vmatpush2.bf16.msra.mxu0 0
  %210 = vmatprep.subr.bf16.mxu0 0
  %211 = vmatpush2.bf16.msra.mxu0 0
  %212 = vmatprep.subr.bf16.mxu0 0
  %213 = vmatpush2.bf16.msra.mxu0 0
  %214 = vmatprep.subr.bf16.mxu0 0
  %215 = vmatpush2.bf16.msra.mxu0 0
  %216 = vmatprep.subr.bf16.mxu0 0
  %217 = vmatpush2.bf16.msra.mxu0 0
  %218 = vmatprep.subr.bf16.mxu0 0
  %219 = vmatpush2.bf16.msra.mxu0 0
  %220 = vmatprep.subr.bf16.mxu0 0
  %221 = vmatpush2.bf16.msra.mxu0 0
  %222 = vmatprep.subr.bf16.mxu0 0
  %223 = vmatpush2.bf16.msra.mxu0 0
  %224 = vmatprep.mubr.bf16.mxu0 0
  %225 = vmatmul.mubr.bf16.gmra.mxu0 %v176
  %v226 = vpop.f32.mrf.mxu0
  %v227 = vadd.f32 0.0, %v226
  %v228 = vpop.f32.mrf.mxu0
  %v229 = vpop.f32.mrf.mxu0
  %v230 = vadd.f32 0.0, %v229
  %v231 = vpop.f32.mrf.mxu0
  %232 = vmatprep.mubr.bf16.mxu0 0
  %233 = vmatmul.mubr.bf16.gmra.mxu0 %v177
  %v234 = vpop.f32.mrf.mxu0
  %v235 = vadd.f32 0.0, %v234
  %v236 = vpop.f32.mrf.mxu0
  %v237 = vpop.f32.mrf.mxu0
  %v238 = vadd.f32 0.0, %v237
  %v239 = vpop.f32.mrf.mxu0
  %240 = vmatprep.mubr.bf16.mxu0 0
  %241 = vmatmul.mubr.bf16.gmra.mxu0 %v178
  %v242 = vpop.f32.mrf.mxu0
  %v243 = vadd.f32 0.0, %v242
  %v244 = vpop.f32.mrf.mxu0
  %v245 = vpop.f32.mrf.mxu0
  %v246 = vadd.f32 0.0, %v245
  %v247 = vpop.f32.mrf.mxu0
  %248 = vmatprep.mubr.bf16.mxu0 0
  %249 = vmatmul.mubr.bf16.gmra.mxu0 %v179
  %v250 = vpop.f32.mrf.mxu0
  %v251 = vadd.f32 0.0, %v250
  %v252 = vpop.f32.mrf.mxu0
  %v253 = vpop.f32.mrf.mxu0
  %v254 = vadd.f32 0.0, %v253
  %v255 = vpop.f32.mrf.mxu0
  %256 = vmatprep.mubr.bf16.mxu0 0
  %257 = vmatmul.mubr.bf16.gmra.mxu0 %v180
  %v258 = vpop.f32.mrf.mxu0
  %v259 = vadd.f32 0.0, %v258
  %v260 = vpop.f32.mrf.mxu0
  %v261 = vpop.f32.mrf.mxu0
  %v262 = vadd.f32 0.0, %v261
  %v263 = vpop.f32.mrf.mxu0
  %264 = vmatprep.mubr.bf16.mxu0 0
  %265 = vmatmul.mubr.bf16.gmra.mxu0 %v181
  %v266 = vpop.f32.mrf.mxu0
  %v267 = vadd.f32 0.0, %v266
  %v268 = vpop.f32.mrf.mxu0
  %v269 = vpop.f32.mrf.mxu0
  %v270 = vadd.f32 0.0, %v269
  %v271 = vpop.f32.mrf.mxu0
  %272 = vmatprep.mubr.bf16.mxu0 0
  %273 = vmatmul.mubr.bf16.gmra.mxu0 %v182
  %v274 = vpop.f32.mrf.mxu0
  %v275 = vadd.f32 0.0, %v274
  %v276 = vpop.f32.mrf.mxu0
  %v277 = vpop.f32.mrf.mxu0
  %v278 = vadd.f32 0.0, %v277
  %v279 = vpop.f32.mrf.mxu0
  %280 = vmatprep.mubr.bf16.mxu0 0
  %281 = vmatmul.mubr.bf16.gmra.mxu0 %v183
  %v282 = vpop.f32.mrf.mxu0
  %v283 = vadd.f32 0.0, %v282
  %v284 = vpop.f32.mrf.mxu0
  %v285 = vpop.f32.mrf.mxu0
  %v286 = vadd.f32 0.0, %v285
  %v287 = vpop.f32.mrf.mxu0
  %288 = vdwg.mxu0
  %290 = vset.pattern.permute.xlu0 0
  %291 = vperm.xlu0 %290, %v103
  %v292 = vpop.permute.xlu0 %291
  %295 = vset.pattern.permute.xlu0 0
  %296 = vperm.xlu0 %295, %v104
  %v297 = vpop.permute.xlu0 %296
  %300 = vset.pattern.permute.xlu0 0
  %301 = vperm.xlu0 %300, %v105
  %v302 = vpop.permute.xlu0 %301
  %305 = vset.pattern.permute.xlu0 0
  %306 = vperm.xlu0 %305, %v106
  %v307 = vpop.permute.xlu0 %306
  %310 = vset.pattern.permute.xlu0 0
  %311 = vperm.xlu0 %310, %v107
  %v312 = vpop.permute.xlu0 %311
  %315 = vset.pattern.permute.xlu0 0
  %316 = vperm.xlu0 %315, %v108
  %v317 = vpop.permute.xlu0 %316
  %320 = vset.pattern.permute.xlu0 0
  %321 = vperm.xlu0 %320, %v109
  %v322 = vpop.permute.xlu0 %321
  %325 = vset.pattern.permute.xlu0 0
  %326 = vperm.xlu0 %325, %v110
  %v327 = vpop.permute.xlu0 %326
  %330 = vset.pattern.permute.xlu0 0
  %331 = vperm.xlu0 %330, %v111
  %v332 = vpop.permute.xlu0 %331
  %335 = vset.pattern.permute.xlu0 0
  %336 = vperm.xlu0 %335, %v112
  %v337 = vpop.permute.xlu0 %336
  %340 = vset.pattern.permute.xlu0 0
  %341 = vperm.xlu0 %340, %v113
  %v342 = vpop.permute.xlu0 %341
  %345 = vset.pattern.permute.xlu0 0
  %346 = vperm.xlu0 %345, %v114
  %v347 = vpop.permute.xlu0 %346
  %350 = vset.pattern.permute.xlu0 0
  %351 = vperm.xlu0 %350, %v115
  %v352 = vpop.permute.xlu0 %351
  %355 = vset.pattern.permute.xlu0 0
  %356 = vperm.xlu0 %355, %v116
  %v357 = vpop.permute.xlu0 %356
  %360 = vset.pattern.permute.xlu0 0
  %361 = vperm.xlu0 %360, %v117
  %v362 = vpop.permute.xlu0 %361
  %365 = vset.pattern.permute.xlu0 0
  %366 = vperm.xlu0 %365, %v118
  %v367 = vpop.permute.xlu0 %366
  %v369 = vmul.f32 %v227, %v292
  %v370 = vmul.f32 %v230, %v297
  %v371 = vmul.f32 %v235, %v302
  %v372 = vmul.f32 %v238, %v307
  %v373 = vmul.f32 %v243, %v312
  %v374 = vmul.f32 %v246, %v317
  %v375 = vmul.f32 %v251, %v322
  %v376 = vmul.f32 %v254, %v327
  %v377 = vmul.f32 %v259, %v332
  %v378 = vmul.f32 %v262, %v337
  %v379 = vmul.f32 %v267, %v342
  %v380 = vmul.f32 %v270, %v347
  %v381 = vmul.f32 %v275, %v352
  %v382 = vmul.f32 %v278, %v357
  %v383 = vmul.f32 %v283, %v362
  %v384 = vmul.f32 %v286, %v367
  %v385 = vpack.c.bf16 %v370, %v369
  %v386 = vpack.c.bf16 %v372, %v371
  %v387 = vpack.c.bf16 %v374, %v373
  %v388 = vpack.c.bf16 %v376, %v375
  %v389 = vpack.c.bf16 %v378, %v377
  %v390 = vpack.c.bf16 %v380, %v379
  %v391 = vpack.c.bf16 %v382, %v381
  %v392 = vpack.c.bf16 %v384, %v383
  %v409 = vunpack.c.l.b16 %v119
  %v410 = vunpack.c.l.b16 %v120
  %v411 = vunpack.c.l.b16 %v121
  %v412 = vunpack.c.l.b16 %v122
  %v413 = vunpack.c.l.b16 %v123
  %v414 = vunpack.c.l.b16 %v124
  %v415 = vunpack.c.l.b16 %v125
  %v416 = vunpack.c.l.b16 %v126
  %v417 = vunpack.c.l.b16 %v127
  %v418 = vunpack.c.l.b16 %v128
  %v419 = vunpack.c.l.b16 %v129
  %v420 = vunpack.c.l.b16 %v130
  %v421 = vunpack.c.l.b16 %v131
  %v422 = vunpack.c.l.b16 %v132
  %v423 = vunpack.c.l.b16 %v133
  %v424 = vunpack.c.l.b16 %v134
  %v425 = vpack.c.b16 %v410, %v409
  %v426 = vpack.c.b16 %v412, %v411
  %v427 = vpack.c.b16 %v414, %v413
  %v428 = vpack.c.b16 %v416, %v415
  %v429 = vpack.c.b16 %v418, %v417
  %v430 = vpack.c.b16 %v420, %v419
  %v431 = vpack.c.b16 %v422, %v421
  %v432 = vpack.c.b16 %v424, %v423
  %441 = vmatprep.subr.bf16.mxu0 0
  %442 = vmatpush1.bf16.msra.mxu0 %v432
  %443 = vmatprep.subr.bf16.mxu0 0
  %444 = vmatpush1.bf16.msra.mxu0 %v431
  %445 = vmatprep.subr.bf16.mxu0 0
  %446 = vmatpush1.bf16.msra.mxu0 %v430
  %447 = vmatprep.subr.bf16.mxu0 0
  %448 = vmatpush1.bf16.msra.mxu0 %v429
  %449 = vmatprep.subr.bf16.mxu0 0
  %450 = vmatpush1.bf16.msra.mxu0 %v428
  %451 = vmatprep.subr.bf16.mxu0 0
  %452 = vmatpush1.bf16.msra.mxu0 %v427
  %453 = vmatprep.subr.bf16.mxu0 0
  %454 = vmatpush1.bf16.msra.mxu0 %v426
  %455 = vmatprep.subr.bf16.mxu0 0
  %456 = vmatpush1.bf16.msra.mxu0 %v425
  %457 = vmatprep.subr.bf16.mxu0 0
  %458 = vmatpush2.bf16.msra.mxu0 0
  %459 = vmatprep.subr.bf16.mxu0 0
  %460 = vmatpush2.bf16.msra.mxu0 0
  %461 = vmatprep.subr.bf16.mxu0 0
  %462 = vmatpush2.bf16.msra.mxu0 0
  %463 = vmatprep.subr.bf16.mxu0 0
  %464 = vmatpush2.bf16.msra.mxu0 0
  %465 = vmatprep.subr.bf16.mxu0 0
  %466 = vmatpush2.bf16.msra.mxu0 0
  %467 = vmatprep.subr.bf16.mxu0 0
  %468 = vmatpush2.bf16.msra.mxu0 0
  %469 = vmatprep.subr.bf16.mxu0 0
  %470 = vmatpush2.bf16.msra.mxu0 0
  %471 = vmatprep.subr.bf16.mxu0 0
  %472 = vmatpush2.bf16.msra.mxu0 0
  %473 = vmatprep.mubr.bf16.mxu0 0
  %474 = vmatmul.mubr.bf16.gmra.mxu0 %v385
  %v475 = vpop.f32.mrf.mxu0
  %v476 = vadd.f32 0.0, %v475
  %v477 = vpop.f32.mrf.mxu0
  %v478 = vpop.f32.mrf.mxu0
  %v479 = vadd.f32 0.0, %v478
  %v480 = vpop.f32.mrf.mxu0
  %481 = vmatprep.mubr.bf16.mxu0 0
  %482 = vmatmul.mubr.bf16.gmra.mxu0 %v386
  %v483 = vpop.f32.mrf.mxu0
  %v484 = vadd.f32 0.0, %v483
  %v485 = vpop.f32.mrf.mxu0
  %v486 = vpop.f32.mrf.mxu0
  %v487 = vadd.f32 0.0, %v486
  %v488 = vpop.f32.mrf.mxu0
  %489 = vmatprep.mubr.bf16.mxu0 0
  %490 = vmatmul.mubr.bf16.gmra.mxu0 %v387
  %v491 = vpop.f32.mrf.mxu0
  %v492 = vadd.f32 0.0, %v491
  %v493 = vpop.f32.mrf.mxu0
  %v494 = vpop.f32.mrf.mxu0
  %v495 = vadd.f32 0.0, %v494
  %v496 = vpop.f32.mrf.mxu0
  %497 = vmatprep.mubr.bf16.mxu0 0
  %498 = vmatmul.mubr.bf16.gmra.mxu0 %v388
  %v499 = vpop.f32.mrf.mxu0
  %v500 = vadd.f32 0.0, %v499
  %v501 = vpop.f32.mrf.mxu0
  %v502 = vpop.f32.mrf.mxu0
  %v503 = vadd.f32 0.0, %v502
  %v504 = vpop.f32.mrf.mxu0
  %505 = vmatprep.mubr.bf16.mxu0 0
  %506 = vmatmul.mubr.bf16.gmra.mxu0 %v389
  %v507 = vpop.f32.mrf.mxu0
  %v508 = vadd.f32 0.0, %v507
  %v509 = vpop.f32.mrf.mxu0
  %v510 = vpop.f32.mrf.mxu0
  %v511 = vadd.f32 0.0, %v510
  %v512 = vpop.f32.mrf.mxu0
  %513 = vmatprep.mubr.bf16.mxu0 0
  %514 = vmatmul.mubr.bf16.gmra.mxu0 %v390
  %v515 = vpop.f32.mrf.mxu0
  %v516 = vadd.f32 0.0, %v515
  %v517 = vpop.f32.mrf.mxu0
  %v518 = vpop.f32.mrf.mxu0
  %v519 = vadd.f32 0.0, %v518
  %v520 = vpop.f32.mrf.mxu0
  %521 = vmatprep.mubr.bf16.mxu0 0
  %522 = vmatmul.mubr.bf16.gmra.mxu0 %v391
  %v523 = vpop.f32.mrf.mxu0
  %v524 = vadd.f32 0.0, %v523
  %v525 = vpop.f32.mrf.mxu0
  %v526 = vpop.f32.mrf.mxu0
  %v527 = vadd.f32 0.0, %v526
  %v528 = vpop.f32.mrf.mxu0
  %529 = vmatprep.mubr.bf16.mxu0 0
  %530 = vmatmul.mubr.bf16.gmra.mxu0 %v392
  %v531 = vpop.f32.mrf.mxu0
  %v532 = vadd.f32 0.0, %v531
  %v533 = vpop.f32.mrf.mxu0
  %v534 = vpop.f32.mrf.mxu0
  %v535 = vadd.f32 0.0, %v534
  %v536 = vpop.f32.mrf.mxu0
  %537 = vdwg.mxu0
  %v538 = vpack.c.bf16 %v479, %v476
  %v539 = vpack.c.bf16 %v487, %v484
  %v540 = vpack.c.bf16 %v495, %v492
  %v541 = vpack.c.bf16 %v503, %v500
  %v542 = vpack.c.bf16 %v511, %v508
  %v543 = vpack.c.bf16 %v519, %v516
  %v544 = vpack.c.bf16 %v527, %v524
  %v545 = vpack.c.bf16 %v535, %v532
  %v562 = vunpack.c.l.b16 %v55
  %v563 = vunpack.c.l.b16 %v56
  %v564 = vunpack.c.l.b16 %v57
  %v565 = vunpack.c.l.b16 %v58
  %v566 = vunpack.c.l.b16 %v59
  %v567 = vunpack.c.l.b16 %v60
  %v568 = vunpack.c.l.b16 %v61
  %v569 = vunpack.c.l.b16 %v62
  %v570 = vunpack.c.l.b16 %v63
  %v571 = vunpack.c.l.b16 %v64
  %v572 = vunpack.c.l.b16 %v65
  %v573 = vunpack.c.l.b16 %v66
  %v574 = vunpack.c.l.b16 %v67
  %v575 = vunpack.c.l.b16 %v68
  %v576 = vunpack.c.l.b16 %v69
  %v577 = vunpack.c.l.b16 %v70
  %v578 = vpack.c.b16 %v563, %v562
  %v579 = vpack.c.b16 %v565, %v564
  %v580 = vpack.c.b16 %v567, %v566
  %v581 = vpack.c.b16 %v569, %v568
  %v582 = vpack.c.b16 %v571, %v570
  %v583 = vpack.c.b16 %v573, %v572
  %v584 = vpack.c.b16 %v575, %v574
  %v585 = vpack.c.b16 %v577, %v576
  %594 = vmatprep.subr.bf16.mxu0 0
  %595 = vmatpush1.bf16.msra.mxu0 %v545
  %596 = vmatprep.subr.bf16.mxu0 0
  %597 = vmatpush1.bf16.msra.mxu0 %v544
  %598 = vmatprep.subr.bf16.mxu0 0
  %599 = vmatpush1.bf16.msra.mxu0 %v543
  %600 = vmatprep.subr.bf16.mxu0 0
  %601 = vmatpush1.bf16.msra.mxu0 %v542
  %602 = vmatprep.subr.bf16.mxu0 0
  %603 = vmatpush1.bf16.msra.mxu0 %v541
  %604 = vmatprep.subr.bf16.mxu0 0
  %605 = vmatpush1.bf16.msra.mxu0 %v540
  %606 = vmatprep.subr.bf16.mxu0 0
  %607 = vmatpush1.bf16.msra.mxu0 %v539
  %608 = vmatprep.subr.bf16.mxu0 0
  %609 = vmatpush1.bf16.msra.mxu0 %v538
  %610 = vmatprep.subr.bf16.mxu0 0
  %611 = vmatpush2.bf16.msra.mxu0 0
  %612 = vmatprep.subr.bf16.mxu0 0
  %613 = vmatpush2.bf16.msra.mxu0 0
  %614 = vmatprep.subr.bf16.mxu0 0
  %615 = vmatpush2.bf16.msra.mxu0 0
  %616 = vmatprep.subr.bf16.mxu0 0
  %617 = vmatpush2.bf16.msra.mxu0 0
  %618 = vmatprep.subr.bf16.mxu0 0
  %619 = vmatpush2.bf16.msra.mxu0 0
  %620 = vmatprep.subr.bf16.mxu0 0
  %621 = vmatpush2.bf16.msra.mxu0 0
  %622 = vmatprep.subr.bf16.mxu0 0
  %623 = vmatpush2.bf16.msra.mxu0 0
  %624 = vmatprep.subr.bf16.mxu0 0
  %625 = vmatpush2.bf16.msra.mxu0 0
  %626 = vmatprep.mubr.bf16.mxu0 0
  %627 = vmatmul.mubr.bf16.gmra.mxu0 %v578
  %v628 = vpop.f32.mrf.mxu0
  %v629 = vadd.f32 0.0, %v628
  %v630 = vpop.f32.mrf.mxu0
  %v631 = vpop.f32.mrf.mxu0
  %v632 = vadd.f32 0.0, %v631
  %v633 = vpop.f32.mrf.mxu0
  %634 = vmatprep.mubr.bf16.mxu0 0
  %635 = vmatmul.mubr.bf16.gmra.mxu0 %v579
  %v636 = vpop.f32.mrf.mxu0
  %v637 = vadd.f32 0.0, %v636
  %v638 = vpop.f32.mrf.mxu0
  %v639 = vpop.f32.mrf.mxu0
  %v640 = vadd.f32 0.0, %v639
  %v641 = vpop.f32.mrf.mxu0
  %642 = vmatprep.mubr.bf16.mxu0 0
  %643 = vmatmul.mubr.bf16.gmra.mxu0 %v580
  %v644 = vpop.f32.mrf.mxu0
  %v645 = vadd.f32 0.0, %v644
  %v646 = vpop.f32.mrf.mxu0
  %v647 = vpop.f32.mrf.mxu0
  %v648 = vadd.f32 0.0, %v647
  %v649 = vpop.f32.mrf.mxu0
  %650 = vmatprep.mubr.bf16.mxu0 0
  %651 = vmatmul.mubr.bf16.gmra.mxu0 %v581
  %v652 = vpop.f32.mrf.mxu0
  %v653 = vadd.f32 0.0, %v652
  %v654 = vpop.f32.mrf.mxu0
  %v655 = vpop.f32.mrf.mxu0
  %v656 = vadd.f32 0.0, %v655
  %v657 = vpop.f32.mrf.mxu0
  %658 = vmatprep.mubr.bf16.mxu0 0
  %659 = vmatmul.mubr.bf16.gmra.mxu0 %v582
  %v660 = vpop.f32.mrf.mxu0
  %v661 = vadd.f32 0.0, %v660
  %v662 = vpop.f32.mrf.mxu0
  %v663 = vpop.f32.mrf.mxu0
  %v664 = vadd.f32 0.0, %v663
  %v665 = vpop.f32.mrf.mxu0
  %666 = vmatprep.mubr.bf16.mxu0 0
  %667 = vmatmul.mubr.bf16.gmra.mxu0 %v583
  %v668 = vpop.f32.mrf.mxu0
  %v669 = vadd.f32 0.0, %v668
  %v670 = vpop.f32.mrf.mxu0
  %v671 = vpop.f32.mrf.mxu0
  %v672 = vadd.f32 0.0, %v671
  %v673 = vpop.f32.mrf.mxu0
  %674 = vmatprep.mubr.bf16.mxu0 0
  %675 = vmatmul.mubr.bf16.gmra.mxu0 %v584
  %v676 = vpop.f32.mrf.mxu0
  %v677 = vadd.f32 0.0, %v676
  %v678 = vpop.f32.mrf.mxu0
  %v679 = vpop.f32.mrf.mxu0
  %v680 = vadd.f32 0.0, %v679
  %v681 = vpop.f32.mrf.mxu0
  %682 = vmatprep.mubr.bf16.mxu0 0
  %683 = vmatmul.mubr.bf16.gmra.mxu0 %v585
  %v684 = vpop.f32.mrf.mxu0
  %v685 = vadd.f32 0.0, %v684
  %v686 = vpop.f32.mrf.mxu0
  %v687 = vpop.f32.mrf.mxu0
  %v688 = vadd.f32 0.0, %v687
  %v689 = vpop.f32.mrf.mxu0
  %690 = vdwg.mxu0
  %692 = vset.pattern.permute.xlu0 0
  %693 = vperm.xlu0 %692, %v87
  %v694 = vpop.permute.xlu0 %693
  %697 = vset.pattern.permute.xlu0 0
  %698 = vperm.xlu0 %697, %v88
  %v699 = vpop.permute.xlu0 %698
  %702 = vset.pattern.permute.xlu0 0
  %703 = vperm.xlu0 %702, %v89
  %v704 = vpop.permute.xlu0 %703
  %707 = vset.pattern.permute.xlu0 0
  %708 = vperm.xlu0 %707, %v90
  %v709 = vpop.permute.xlu0 %708
  %712 = vset.pattern.permute.xlu0 0
  %713 = vperm.xlu0 %712, %v91
  %v714 = vpop.permute.xlu0 %713
  %717 = vset.pattern.permute.xlu0 0
  %718 = vperm.xlu0 %717, %v92
  %v719 = vpop.permute.xlu0 %718
  %722 = vset.pattern.permute.xlu0 0
  %723 = vperm.xlu0 %722, %v93
  %v724 = vpop.permute.xlu0 %723
  %727 = vset.pattern.permute.xlu0 0
  %728 = vperm.xlu0 %727, %v94
  %v729 = vpop.permute.xlu0 %728
  %732 = vset.pattern.permute.xlu0 0
  %733 = vperm.xlu0 %732, %v95
  %v734 = vpop.permute.xlu0 %733
  %737 = vset.pattern.permute.xlu0 0
  %738 = vperm.xlu0 %737, %v96
  %v739 = vpop.permute.xlu0 %738
  %742 = vset.pattern.permute.xlu0 0
  %743 = vperm.xlu0 %742, %v97
  %v744 = vpop.permute.xlu0 %743
  %747 = vset.pattern.permute.xlu0 0
  %748 = vperm.xlu0 %747, %v98
  %v749 = vpop.permute.xlu0 %748
  %752 = vset.pattern.permute.xlu0 0
  %753 = vperm.xlu0 %752, %v99
  %v754 = vpop.permute.xlu0 %753
  %757 = vset.pattern.permute.xlu0 0
  %758 = vperm.xlu0 %757, %v100
  %v759 = vpop.permute.xlu0 %758
  %762 = vset.pattern.permute.xlu0 0
  %763 = vperm.xlu0 %762, %v101
  %v764 = vpop.permute.xlu0 %763
  %767 = vset.pattern.permute.xlu0 0
  %768 = vperm.xlu0 %767, %v102
  %v769 = vpop.permute.xlu0 %768
  %v771 = vmul.f32 %v629, %v694
  %v772 = vmul.f32 %v632, %v699
  %v773 = vmul.f32 %v637, %v704
  %v774 = vmul.f32 %v640, %v709
  %v775 = vmul.f32 %v645, %v714
  %v776 = vmul.f32 %v648, %v719
  %v777 = vmul.f32 %v653, %v724
  %v778 = vmul.f32 %v656, %v729
  %v779 = vmul.f32 %v661, %v734
  %v780 = vmul.f32 %v664, %v739
  %v781 = vmul.f32 %v669, %v744
  %v782 = vmul.f32 %v672, %v749
  %v783 = vmul.f32 %v677, %v754
  %v784 = vmul.f32 %v680, %v759
  %v785 = vmul.f32 %v685, %v764
  %v786 = vmul.f32 %v688, %v769
  %v788 = vlaneseq
  %v789 = vshrl.u32 %v788, 7
  %v790 = vsub.s32 0, %v789
  %v791 = vrot.slane %v135, %v790
  %v793 = vadd.f32 %v771, %v791
  %v794 = vadd.f32 %v772, %v791
  %v795 = vadd.f32 %v773, %v791
  %v796 = vadd.f32 %v774, %v791
  %v797 = vadd.f32 %v775, %v791
  %v798 = vadd.f32 %v776, %v791
  %v799 = vadd.f32 %v777, %v791
  %v800 = vadd.f32 %v778, %v791
  %v801 = vadd.f32 %v779, %v791
  %v802 = vadd.f32 %v780, %v791
  %v803 = vadd.f32 %v781, %v791
  %v804 = vadd.f32 %v782, %v791
  %v805 = vadd.f32 %v783, %v791
  %v806 = vadd.f32 %v784, %v791
  %v807 = vadd.f32 %v785, %v791
  %v808 = vadd.f32 %v786, %v791
  %v809 = vmax.f32 %v793, 0.0
  %v810 = vmax.f32 %v794, 0.0
  %v811 = vmax.f32 %v795, 0.0
  %v812 = vmax.f32 %v796, 0.0
  %v813 = vmax.f32 %v797, 0.0
  %v814 = vmax.f32 %v798, 0.0
  %v815 = vmax.f32 %v799, 0.0
  %v816 = vmax.f32 %v800, 0.0
  %v817 = vmax.f32 %v801, 0.0
  %v818 = vmax.f32 %v802, 0.0
  %v819 = vmax.f32 %v803, 0.0
  %v820 = vmax.f32 %v804, 0.0
  %v821 = vmax.f32 %v805, 0.0
  %v822 = vmax.f32 %v806, 0.0
  %v823 = vmax.f32 %v807, 0.0
  %v824 = vmax.f32 %v808, 0.0
  %v825 = vlaneseq
  %v826 = vand.u32 %v825, 127
  %vm827 = vcmp.lt.s32.totalorder %v826, 32
  %v828 = vsel %vm827, 1, 0
  %v829 = vcvt.s32.f32 %v828
  %830 = vadd.xlane.f32.xlu0 %v809
  %v831 = vpop.xlane.xlu0 %830
  %832 = vadd.xlane.f32.xlu0 %v810
  %v833 = vpop.xlane.xlu0 %832
  %834 = vadd.xlane.f32.xlu0 %v811
  %v835 = vpop.xlane.xlu0 %834
  %836 = vadd.xlane.f32.xlu0 %v812
  %v837 = vpop.xlane.xlu0 %836
  %838 = vadd.xlane.f32.xlu0 %v813
  %v839 = vpop.xlane.xlu0 %838
  %840 = vadd.xlane.f32.xlu0 %v814
  %v841 = vpop.xlane.xlu0 %840
  %842 = vadd.xlane.f32.xlu0 %v815
  %v843 = vpop.xlane.xlu0 %842
  %844 = vadd.xlane.f32.xlu0 %v816
  %v845 = vpop.xlane.xlu0 %844
  %846 = vadd.xlane.f32.xlu0 %v817
  %v847 = vpop.xlane.xlu0 %846
  %848 = vadd.xlane.f32.xlu0 %v818
  %v849 = vpop.xlane.xlu0 %848
  %850 = vadd.xlane.f32.xlu0 %v819
  %v851 = vpop.xlane.xlu0 %850
  %852 = vadd.xlane.f32.xlu0 %v820
  %v853 = vpop.xlane.xlu0 %852
  %854 = vadd.xlane.f32.xlu0 %v821
  %v855 = vpop.xlane.xlu0 %854
  %856 = vadd.xlane.f32.xlu0 %v822
  %v857 = vpop.xlane.xlu0 %856
  %858 = vadd.xlane.f32.xlu0 %v823
  %v859 = vpop.xlane.xlu0 %858
  %860 = vadd.xlane.f32.xlu0 %v824
  %v861 = vpop.xlane.xlu0 %860
  %v862 = vmul.f32 %v831, 0.03125
  %v863 = vmul.f32 %v833, 0.03125
  %v864 = vmul.f32 %v835, 0.03125
  %v865 = vmul.f32 %v837, 0.03125
  %v866 = vmul.f32 %v839, 0.03125
  %v867 = vmul.f32 %v841, 0.03125
  %v868 = vmul.f32 %v843, 0.03125
  %v869 = vmul.f32 %v845, 0.03125
  %v870 = vmul.f32 %v847, 0.03125
  %v871 = vmul.f32 %v849, 0.03125
  %v872 = vmul.f32 %v851, 0.03125
  %v873 = vmul.f32 %v853, 0.03125
  %v874 = vmul.f32 %v855, 0.03125
  %v875 = vmul.f32 %v857, 0.03125
  %v876 = vmul.f32 %v859, 0.03125
  %v877 = vmul.f32 %v861, 0.03125
  %v878 = vsub.f32 %v809, %v862
  %v879 = vsub.f32 %v810, %v863
  %v880 = vsub.f32 %v811, %v864
  %v881 = vsub.f32 %v812, %v865
  %v882 = vsub.f32 %v813, %v866
  %v883 = vsub.f32 %v814, %v867
  %v884 = vsub.f32 %v815, %v868
  %v885 = vsub.f32 %v816, %v869
  %v886 = vsub.f32 %v817, %v870
  %v887 = vsub.f32 %v818, %v871
  %v888 = vsub.f32 %v819, %v872
  %v889 = vsub.f32 %v820, %v873
  %v890 = vsub.f32 %v821, %v874
  %v891 = vsub.f32 %v822, %v875
  %v892 = vsub.f32 %v823, %v876
  %v893 = vsub.f32 %v824, %v877
  %v894 = vmul.f32 %v878, %v829
  %v895 = vmul.f32 %v879, %v829
  %v896 = vmul.f32 %v880, %v829
  %v897 = vmul.f32 %v881, %v829
  %v898 = vmul.f32 %v882, %v829
  %v899 = vmul.f32 %v883, %v829
  %v900 = vmul.f32 %v884, %v829
  %v901 = vmul.f32 %v885, %v829
  %v902 = vmul.f32 %v886, %v829
  %v903 = vmul.f32 %v887, %v829
  %v904 = vmul.f32 %v888, %v829
  %v905 = vmul.f32 %v889, %v829
  %v906 = vmul.f32 %v890, %v829
  %v907 = vmul.f32 %v891, %v829
  %v908 = vmul.f32 %v892, %v829
  %v909 = vmul.f32 %v893, %v829
  %v910 = vmul.f32 %v894, %v894
  %v911 = vmul.f32 %v895, %v895
  %v912 = vmul.f32 %v896, %v896
  %v913 = vmul.f32 %v897, %v897
  %v914 = vmul.f32 %v898, %v898
  %v915 = vmul.f32 %v899, %v899
  %v916 = vmul.f32 %v900, %v900
  %v917 = vmul.f32 %v901, %v901
  %v918 = vmul.f32 %v902, %v902
  %v919 = vmul.f32 %v903, %v903
  %v920 = vmul.f32 %v904, %v904
  %v921 = vmul.f32 %v905, %v905
  %v922 = vmul.f32 %v906, %v906
  %v923 = vmul.f32 %v907, %v907
  %v924 = vmul.f32 %v908, %v908
  %v925 = vmul.f32 %v909, %v909
  %926 = vadd.xlane.f32.xlu0 %v910
  %v927 = vpop.xlane.xlu0 %926
  %928 = vadd.xlane.f32.xlu0 %v911
  %v929 = vpop.xlane.xlu0 %928
  %930 = vadd.xlane.f32.xlu0 %v912
  %v931 = vpop.xlane.xlu0 %930
  %932 = vadd.xlane.f32.xlu0 %v913
  %v933 = vpop.xlane.xlu0 %932
  %934 = vadd.xlane.f32.xlu0 %v914
  %v935 = vpop.xlane.xlu0 %934
  %936 = vadd.xlane.f32.xlu0 %v915
  %v937 = vpop.xlane.xlu0 %936
  %938 = vadd.xlane.f32.xlu0 %v916
  %v939 = vpop.xlane.xlu0 %938
  %940 = vadd.xlane.f32.xlu0 %v917
  %v941 = vpop.xlane.xlu0 %940
  %942 = vadd.xlane.f32.xlu0 %v918
  %v943 = vpop.xlane.xlu0 %942
  %944 = vadd.xlane.f32.xlu0 %v919
  %v945 = vpop.xlane.xlu0 %944
  %946 = vadd.xlane.f32.xlu0 %v920
  %v947 = vpop.xlane.xlu0 %946
  %948 = vadd.xlane.f32.xlu0 %v921
  %v949 = vpop.xlane.xlu0 %948
  %950 = vadd.xlane.f32.xlu0 %v922
  %v951 = vpop.xlane.xlu0 %950
  %952 = vadd.xlane.f32.xlu0 %v923
  %v953 = vpop.xlane.xlu0 %952
  %954 = vadd.xlane.f32.xlu0 %v924
  %v955 = vpop.xlane.xlu0 %954
  %956 = vadd.xlane.f32.xlu0 %v925
  %v957 = vpop.xlane.xlu0 %956
  %v958 = vmul.f32 %v927, 0.03125
  %v959 = vmul.f32 %v929, 0.03125
  %v960 = vmul.f32 %v931, 0.03125
  %v961 = vmul.f32 %v933, 0.03125
  %v962 = vmul.f32 %v935, 0.03125
  %v963 = vmul.f32 %v937, 0.03125
  %v964 = vmul.f32 %v939, 0.03125
  %v965 = vmul.f32 %v941, 0.03125
  %v966 = vmul.f32 %v943, 0.03125
  %v967 = vmul.f32 %v945, 0.03125
  %v968 = vmul.f32 %v947, 0.03125
  %v969 = vmul.f32 %v949, 0.03125
  %v970 = vmul.f32 %v951, 0.03125
  %v971 = vmul.f32 %v953, 0.03125
  %v972 = vmul.f32 %v955, 0.03125
  %v973 = vmul.f32 %v957, 0.03125
  %v974 = vadd.f32 %v958, 1e-05
  %v975 = vadd.f32 %v959, 1e-05
  %v976 = vadd.f32 %v960, 1e-05
  %v977 = vadd.f32 %v961, 1e-05
  %v978 = vadd.f32 %v962, 1e-05
  %v979 = vadd.f32 %v963, 1e-05
  %v980 = vadd.f32 %v964, 1e-05
  %v981 = vadd.f32 %v965, 1e-05
  %v982 = vadd.f32 %v966, 1e-05
  %v983 = vadd.f32 %v967, 1e-05
  %v984 = vadd.f32 %v968, 1e-05
  %v985 = vadd.f32 %v969, 1e-05
  %v986 = vadd.f32 %v970, 1e-05
  %v987 = vadd.f32 %v971, 1e-05
  %v988 = vadd.f32 %v972, 1e-05
  %v989 = vadd.f32 %v973, 1e-05
  %v990 = vrsqrt.pop %v974
  %v991 = vrsqrt.pop %v975
  %v992 = vrsqrt.pop %v976
  %v993 = vrsqrt.pop %v977
  %v994 = vrsqrt.pop %v978
  %v995 = vrsqrt.pop %v979
  %v996 = vrsqrt.pop %v980
  %v997 = vrsqrt.pop %v981
  %v998 = vrsqrt.pop %v982
  %v999 = vrsqrt.pop %v983
  %v1000 = vrsqrt.pop %v984
  %v1001 = vrsqrt.pop %v985
  %v1002 = vrsqrt.pop %v986
  %v1003 = vrsqrt.pop %v987
  %v1004 = vrsqrt.pop %v988
  %v1005 = vrsqrt.pop %v989
  %v1006 = vmul.f32 %v894, %v990
  %v1007 = vmul.f32 %v895, %v991
  %v1008 = vmul.f32 %v896, %v992
  %v1009 = vmul.f32 %v897, %v993
  %v1010 = vmul.f32 %v898, %v994
  %v1011 = vmul.f32 %v899, %v995
  %v1012 = vmul.f32 %v900, %v996
  %v1013 = vmul.f32 %v901, %v997
  %v1014 = vmul.f32 %v902, %v998
  %v1015 = vmul.f32 %v903, %v999
  %v1016 = vmul.f32 %v904, %v1000
  %v1017 = vmul.f32 %v905, %v1001
  %v1018 = vmul.f32 %v906, %v1002
  %v1019 = vmul.f32 %v907, %v1003
  %v1020 = vmul.f32 %v908, %v1004
  %v1021 = vmul.f32 %v909, %v1005
  %v1022 = vld [vmem:[%s7] sm:$0x1]
  %v1024 = vlaneseq
  %v1025 = vshrl.u32 %v1024, 7
  %v1026 = vsub.s32 0, %v1025
  %v1027 = vrot.slane %v1022, %v1026
  %v1029 = vmul.f32 %v1006, %v1027
  %v1030 = vmul.f32 %v1007, %v1027
  %v1031 = vmul.f32 %v1008, %v1027
  %v1032 = vmul.f32 %v1009, %v1027
  %v1033 = vmul.f32 %v1010, %v1027
  %v1034 = vmul.f32 %v1011, %v1027
  %v1035 = vmul.f32 %v1012, %v1027
  %v1036 = vmul.f32 %v1013, %v1027
  %v1037 = vmul.f32 %v1014, %v1027
  %v1038 = vmul.f32 %v1015, %v1027
  %v1039 = vmul.f32 %v1016, %v1027
  %v1040 = vmul.f32 %v1017, %v1027
  %v1041 = vmul.f32 %v1018, %v1027
  %v1042 = vmul.f32 %v1019, %v1027
  %v1043 = vmul.f32 %v1020, %v1027
  %v1044 = vmul.f32 %v1021, %v1027
  %v1045 = vld [vmem:[%s8] sm:$0x1]
  %v1047 = vlaneseq
  %v1048 = vshrl.u32 %v1047, 7
  %v1049 = vsub.s32 0, %v1048
  %v1050 = vrot.slane %v1045, %v1049
  %v1052 = vadd.f32 %v1029, %v1050
  %v1053 = vadd.f32 %v1030, %v1050
  %v1054 = vadd.f32 %v1031, %v1050
  %v1055 = vadd.f32 %v1032, %v1050
  %v1056 = vadd.f32 %v1033, %v1050
  %v1057 = vadd.f32 %v1034, %v1050
  %v1058 = vadd.f32 %v1035, %v1050
  %v1059 = vadd.f32 %v1036, %v1050
  %v1060 = vadd.f32 %v1037, %v1050
  %v1061 = vadd.f32 %v1038, %v1050
  %v1062 = vadd.f32 %v1039, %v1050
  %v1063 = vadd.f32 %v1040, %v1050
  %v1064 = vadd.f32 %v1041, %v1050
  %v1065 = vadd.f32 %v1042, %v1050
  %v1066 = vadd.f32 %v1043, %v1050
  %v1067 = vadd.f32 %v1044, %v1050
  %v1068 = vld [vmem:[%s9] sm:$0xf]
  %v1069 = vld [vmem:[%s9 + $0x4] sm:$0xf]
  %v1070 = vld [vmem:[%s9 + $0x8] sm:$0xf]
  %v1071 = vld [vmem:[%s9 + $0xc] sm:$0xf]
  %v1072 = vld [vmem:[%s9 + $0x10] sm:$0xf]
  %v1073 = vld [vmem:[%s9 + $0x14] sm:$0xf]
  %v1074 = vld [vmem:[%s9 + $0x18] sm:$0xf]
  %v1075 = vld [vmem:[%s9 + $0x1c] sm:$0xf]
  %v1076 = vld [vmem:[%s9 + $0x20] sm:$0xf]
  %v1077 = vld [vmem:[%s9 + $0x24] sm:$0xf]
  %v1078 = vld [vmem:[%s9 + $0x28] sm:$0xf]
  %v1079 = vld [vmem:[%s9 + $0x2c] sm:$0xf]
  %v1080 = vld [vmem:[%s9 + $0x30] sm:$0xf]
  %v1081 = vld [vmem:[%s9 + $0x34] sm:$0xf]
  %v1082 = vld [vmem:[%s9 + $0x38] sm:$0xf]
  %v1083 = vld [vmem:[%s9 + $0x3c] sm:$0xf]
  %v1084 = vld [vmem:[%s10] sm:$0x1]
  %v1085 = vpack.c.bf16 %v1053, %v1052
  %v1086 = vpack.c.bf16 %v1055, %v1054
  %v1087 = vpack.c.bf16 %v1057, %v1056
  %v1088 = vpack.c.bf16 %v1059, %v1058
  %v1089 = vpack.c.bf16 %v1061, %v1060
  %v1090 = vpack.c.bf16 %v1063, %v1062
  %v1091 = vpack.c.bf16 %v1065, %v1064
  %v1092 = vpack.c.bf16 %v1067, %v1066
  %1093 = vmatprep.subr.bf16.mxu0 0
  %1094 = vmatpush1.bf16.msra.mxu0 %v1092
  %1095 = vmatprep.subr.bf16.mxu0 0
  %1096 = vmatpush1.bf16.msra.mxu0 %v1091
  %1097 = vmatprep.subr.bf16.mxu0 0
  %1098 = vmatpush1.bf16.msra.mxu0 %v1090
  %1099 = vmatprep.subr.bf16.mxu0 0
  %1100 = vmatpush1.bf16.msra.mxu0 %v1089
  %1101 = vmatprep.subr.bf16.mxu0 0
  %1102 = vmatpush1.bf16.msra.mxu0 %v1088
  %1103 = vmatprep.subr.bf16.mxu0 0
  %1104 = vmatpush1.bf16.msra.mxu0 %v1087
  %1105 = vmatprep.subr.bf16.mxu0 0
  %1106 = vmatpush1.bf16.msra.mxu0 %v1086
  %1107 = vmatprep.subr.bf16.mxu0 0
  %1108 = vmatpush1.bf16.msra.mxu0 %v1085
  %1109 = vmatprep.subr.bf16.mxu0 0
  %1110 = vmatpush2.bf16.msra.mxu0 0
  %1111 = vmatprep.subr.bf16.mxu0 0
  %1112 = vmatpush2.bf16.msra.mxu0 0
  %1113 = vmatprep.subr.bf16.mxu0 0
  %1114 = vmatpush2.bf16.msra.mxu0 0
  %1115 = vmatprep.subr.bf16.mxu0 0
  %1116 = vmatpush2.bf16.msra.mxu0 0
  %1117 = vmatprep.subr.bf16.mxu0 0
  %1118 = vmatpush2.bf16.msra.mxu0 0
  %1119 = vmatprep.subr.bf16.mxu0 0
  %1120 = vmatpush2.bf16.msra.mxu0 0
  %1121 = vmatprep.subr.bf16.mxu0 0
  %1122 = vmatpush2.bf16.msra.mxu0 0
  %1123 = vmatprep.subr.bf16.mxu0 0
  %1124 = vmatpush2.bf16.msra.mxu0 0
  %1125 = vmatprep.mubr.bf16.mxu0 0
  %1126 = vmatmul.mubr.bf16.gmra.mxu0 %v176
  %v1127 = vpop.f32.mrf.mxu0
  %v1128 = vadd.f32 0.0, %v1127
  %v1129 = vpop.f32.mrf.mxu0
  %v1130 = vpop.f32.mrf.mxu0
  %v1131 = vadd.f32 0.0, %v1130
  %v1132 = vpop.f32.mrf.mxu0
  %1133 = vmatprep.mubr.bf16.mxu0 0
  %1134 = vmatmul.mubr.bf16.gmra.mxu0 %v177
  %v1135 = vpop.f32.mrf.mxu0
  %v1136 = vadd.f32 0.0, %v1135
  %v1137 = vpop.f32.mrf.mxu0
  %v1138 = vpop.f32.mrf.mxu0
  %v1139 = vadd.f32 0.0, %v1138
  %v1140 = vpop.f32.mrf.mxu0
  %1141 = vmatprep.mubr.bf16.mxu0 0
  %1142 = vmatmul.mubr.bf16.gmra.mxu0 %v178
  %v1143 = vpop.f32.mrf.mxu0
  %v1144 = vadd.f32 0.0, %v1143
  %v1145 = vpop.f32.mrf.mxu0
  %v1146 = vpop.f32.mrf.mxu0
  %v1147 = vadd.f32 0.0, %v1146
  %v1148 = vpop.f32.mrf.mxu0
  %1149 = vmatprep.mubr.bf16.mxu0 0
  %1150 = vmatmul.mubr.bf16.gmra.mxu0 %v179
  %v1151 = vpop.f32.mrf.mxu0
  %v1152 = vadd.f32 0.0, %v1151
  %v1153 = vpop.f32.mrf.mxu0
  %v1154 = vpop.f32.mrf.mxu0
  %v1155 = vadd.f32 0.0, %v1154
  %v1156 = vpop.f32.mrf.mxu0
  %1157 = vmatprep.mubr.bf16.mxu0 0
  %1158 = vmatmul.mubr.bf16.gmra.mxu0 %v180
  %v1159 = vpop.f32.mrf.mxu0
  %v1160 = vadd.f32 0.0, %v1159
  %v1161 = vpop.f32.mrf.mxu0
  %v1162 = vpop.f32.mrf.mxu0
  %v1163 = vadd.f32 0.0, %v1162
  %v1164 = vpop.f32.mrf.mxu0
  %1165 = vmatprep.mubr.bf16.mxu0 0
  %1166 = vmatmul.mubr.bf16.gmra.mxu0 %v181
  %v1167 = vpop.f32.mrf.mxu0
  %v1168 = vadd.f32 0.0, %v1167
  %v1169 = vpop.f32.mrf.mxu0
  %v1170 = vpop.f32.mrf.mxu0
  %v1171 = vadd.f32 0.0, %v1170
  %v1172 = vpop.f32.mrf.mxu0
  %1173 = vmatprep.mubr.bf16.mxu0 0
  %1174 = vmatmul.mubr.bf16.gmra.mxu0 %v182
  %v1175 = vpop.f32.mrf.mxu0
  %v1176 = vadd.f32 0.0, %v1175
  %v1177 = vpop.f32.mrf.mxu0
  %v1178 = vpop.f32.mrf.mxu0
  %v1179 = vadd.f32 0.0, %v1178
  %v1180 = vpop.f32.mrf.mxu0
  %1181 = vmatprep.mubr.bf16.mxu0 0
  %1182 = vmatmul.mubr.bf16.gmra.mxu0 %v183
  %v1183 = vpop.f32.mrf.mxu0
  %v1184 = vadd.f32 0.0, %v1183
  %v1185 = vpop.f32.mrf.mxu0
  %v1186 = vpop.f32.mrf.mxu0
  %v1187 = vadd.f32 0.0, %v1186
  %v1188 = vpop.f32.mrf.mxu0
  %1189 = vdwg.mxu0
  %v1190 = vmul.f32 %v1128, %v292
  %v1191 = vmul.f32 %v1131, %v297
  %v1192 = vmul.f32 %v1136, %v302
  %v1193 = vmul.f32 %v1139, %v307
  %v1194 = vmul.f32 %v1144, %v312
  %v1195 = vmul.f32 %v1147, %v317
  %v1196 = vmul.f32 %v1152, %v322
  %v1197 = vmul.f32 %v1155, %v327
  %v1198 = vmul.f32 %v1160, %v332
  %v1199 = vmul.f32 %v1163, %v337
  %v1200 = vmul.f32 %v1168, %v342
  %v1201 = vmul.f32 %v1171, %v347
  %v1202 = vmul.f32 %v1176, %v352
  %v1203 = vmul.f32 %v1179, %v357
  %v1204 = vmul.f32 %v1184, %v362
  %v1205 = vmul.f32 %v1187, %v367
  %v1206 = vpack.c.bf16 %v1191, %v1190
  %v1207 = vpack.c.bf16 %v1193, %v1192
  %v1208 = vpack.c.bf16 %v1195, %v1194
  %v1209 = vpack.c.bf16 %v1197, %v1196
  %v1210 = vpack.c.bf16 %v1199, %v1198
  %v1211 = vpack.c.bf16 %v1201, %v1200
  %v1212 = vpack.c.bf16 %v1203, %v1202
  %v1213 = vpack.c.bf16 %v1205, %v1204
  %v1230 = vunpack.c.l.b16 %v1068
  %v1231 = vunpack.c.l.b16 %v1069
  %v1232 = vunpack.c.l.b16 %v1070
  %v1233 = vunpack.c.l.b16 %v1071
  %v1234 = vunpack.c.l.b16 %v1072
  %v1235 = vunpack.c.l.b16 %v1073
  %v1236 = vunpack.c.l.b16 %v1074
  %v1237 = vunpack.c.l.b16 %v1075
  %v1238 = vunpack.c.l.b16 %v1076
  %v1239 = vunpack.c.l.b16 %v1077
  %v1240 = vunpack.c.l.b16 %v1078
  %v1241 = vunpack.c.l.b16 %v1079
  %v1242 = vunpack.c.l.b16 %v1080
  %v1243 = vunpack.c.l.b16 %v1081
  %v1244 = vunpack.c.l.b16 %v1082
  %v1245 = vunpack.c.l.b16 %v1083
  %v1246 = vpack.c.b16 %v1231, %v1230
  %v1247 = vpack.c.b16 %v1233, %v1232
  %v1248 = vpack.c.b16 %v1235, %v1234
  %v1249 = vpack.c.b16 %v1237, %v1236
  %v1250 = vpack.c.b16 %v1239, %v1238
  %v1251 = vpack.c.b16 %v1241, %v1240
  %v1252 = vpack.c.b16 %v1243, %v1242
  %v1253 = vpack.c.b16 %v1245, %v1244
  %1262 = vmatprep.subr.bf16.mxu0 0
  %1263 = vmatpush1.bf16.msra.mxu0 %v1253
  %1264 = vmatprep.subr.bf16.mxu0 0
  %1265 = vmatpush1.bf16.msra.mxu0 %v1252
  %1266 = vmatprep.subr.bf16.mxu0 0
  %1267 = vmatpush1.bf16.msra.mxu0 %v1251
  %1268 = vmatprep.subr.bf16.mxu0 0
  %1269 = vmatpush1.bf16.msra.mxu0 %v1250
  %1270 = vmatprep.subr.bf16.mxu0 0
  %1271 = vmatpush1.bf16.msra.mxu0 %v1249
  %1272 = vmatprep.subr.bf16.mxu0 0
  %1273 = vmatpush1.bf16.msra.mxu0 %v1248
  %1274 = vmatprep.subr.bf16.mxu0 0
  %1275 = vmatpush1.bf16.msra.mxu0 %v1247
  %1276 = vmatprep.subr.bf16.mxu0 0
  %1277 = vmatpush1.bf16.msra.mxu0 %v1246
  %1278 = vmatprep.subr.bf16.mxu0 0
  %1279 = vmatpush2.bf16.msra.mxu0 0
  %1280 = vmatprep.subr.bf16.mxu0 0
  %1281 = vmatpush2.bf16.msra.mxu0 0
  %1282 = vmatprep.subr.bf16.mxu0 0
  %1283 = vmatpush2.bf16.msra.mxu0 0
  %1284 = vmatprep.subr.bf16.mxu0 0
  %1285 = vmatpush2.bf16.msra.mxu0 0
  %1286 = vmatprep.subr.bf16.mxu0 0
  %1287 = vmatpush2.bf16.msra.mxu0 0
  %1288 = vmatprep.subr.bf16.mxu0 0
  %1289 = vmatpush2.bf16.msra.mxu0 0
  %1290 = vmatprep.subr.bf16.mxu0 0
  %1291 = vmatpush2.bf16.msra.mxu0 0
  %1292 = vmatprep.subr.bf16.mxu0 0
  %1293 = vmatpush2.bf16.msra.mxu0 0
  %1294 = vmatprep.mubr.bf16.mxu0 0
  %1295 = vmatmul.mubr.bf16.gmra.mxu0 %v1206
  %v1296 = vpop.f32.mrf.mxu0
  %v1297 = vadd.f32 0.0, %v1296
  %v1298 = vpop.f32.mrf.mxu0
  %v1299 = vpop.f32.mrf.mxu0
  %v1300 = vadd.f32 0.0, %v1299
  %v1301 = vpop.f32.mrf.mxu0
  %1302 = vmatprep.mubr.bf16.mxu0 0
  %1303 = vmatmul.mubr.bf16.gmra.mxu0 %v1207
  %v1304 = vpop.f32.mrf.mxu0
  %v1305 = vadd.f32 0.0, %v1304
  %v1306 = vpop.f32.mrf.mxu0
  %v1307 = vpop.f32.mrf.mxu0
  %v1308 = vadd.f32 0.0, %v1307
  %v1309 = vpop.f32.mrf.mxu0
  %1310 = vmatprep.mubr.bf16.mxu0 0
  %1311 = vmatmul.mubr.bf16.gmra.mxu0 %v1208
  %v1312 = vpop.f32.mrf.mxu0
  %v1313 = vadd.f32 0.0, %v1312
  %v1314 = vpop.f32.mrf.mxu0
  %v1315 = vpop.f32.mrf.mxu0
  %v1316 = vadd.f32 0.0, %v1315
  %v1317 = vpop.f32.mrf.mxu0
  %1318 = vmatprep.mubr.bf16.mxu0 0
  %1319 = vmatmul.mubr.bf16.gmra.mxu0 %v1209
  %v1320 = vpop.f32.mrf.mxu0
  %v1321 = vadd.f32 0.0, %v1320
  %v1322 = vpop.f32.mrf.mxu0
  %v1323 = vpop.f32.mrf.mxu0
  %v1324 = vadd.f32 0.0, %v1323
  %v1325 = vpop.f32.mrf.mxu0
  %1326 = vmatprep.mubr.bf16.mxu0 0
  %1327 = vmatmul.mubr.bf16.gmra.mxu0 %v1210
  %v1328 = vpop.f32.mrf.mxu0
  %v1329 = vadd.f32 0.0, %v1328
  %v1330 = vpop.f32.mrf.mxu0
  %v1331 = vpop.f32.mrf.mxu0
  %v1332 = vadd.f32 0.0, %v1331
  %v1333 = vpop.f32.mrf.mxu0
  %1334 = vmatprep.mubr.bf16.mxu0 0
  %1335 = vmatmul.mubr.bf16.gmra.mxu0 %v1211
  %v1336 = vpop.f32.mrf.mxu0
  %v1337 = vadd.f32 0.0, %v1336
  %v1338 = vpop.f32.mrf.mxu0
  %v1339 = vpop.f32.mrf.mxu0
  %v1340 = vadd.f32 0.0, %v1339
  %v1341 = vpop.f32.mrf.mxu0
  %1342 = vmatprep.mubr.bf16.mxu0 0
  %1343 = vmatmul.mubr.bf16.gmra.mxu0 %v1212
  %v1344 = vpop.f32.mrf.mxu0
  %v1345 = vadd.f32 0.0, %v1344
  %v1346 = vpop.f32.mrf.mxu0
  %v1347 = vpop.f32.mrf.mxu0
  %v1348 = vadd.f32 0.0, %v1347
  %v1349 = vpop.f32.mrf.mxu0
  %1350 = vmatprep.mubr.bf16.mxu0 0
  %1351 = vmatmul.mubr.bf16.gmra.mxu0 %v1213
  %v1352 = vpop.f32.mrf.mxu0
  %v1353 = vadd.f32 0.0, %v1352
  %v1354 = vpop.f32.mrf.mxu0
  %v1355 = vpop.f32.mrf.mxu0
  %v1356 = vadd.f32 0.0, %v1355
  %v1357 = vpop.f32.mrf.mxu0
  %1358 = vdwg.mxu0
  %v1359 = vpack.c.bf16 %v1300, %v1297
  %v1360 = vpack.c.bf16 %v1308, %v1305
  %v1361 = vpack.c.bf16 %v1316, %v1313
  %v1362 = vpack.c.bf16 %v1324, %v1321
  %v1363 = vpack.c.bf16 %v1332, %v1329
  %v1364 = vpack.c.bf16 %v1340, %v1337
  %v1365 = vpack.c.bf16 %v1348, %v1345
  %v1366 = vpack.c.bf16 %v1356, %v1353
  %1367 = vmatprep.subr.bf16.mxu0 0
  %1368 = vmatpush1.bf16.msra.mxu0 %v1366
  %1369 = vmatprep.subr.bf16.mxu0 0
  %1370 = vmatpush1.bf16.msra.mxu0 %v1365
  %1371 = vmatprep.subr.bf16.mxu0 0
  %1372 = vmatpush1.bf16.msra.mxu0 %v1364
  %1373 = vmatprep.subr.bf16.mxu0 0
  %1374 = vmatpush1.bf16.msra.mxu0 %v1363
  %1375 = vmatprep.subr.bf16.mxu0 0
  %1376 = vmatpush1.bf16.msra.mxu0 %v1362
  %1377 = vmatprep.subr.bf16.mxu0 0
  %1378 = vmatpush1.bf16.msra.mxu0 %v1361
  %1379 = vmatprep.subr.bf16.mxu0 0
  %1380 = vmatpush1.bf16.msra.mxu0 %v1360
  %1381 = vmatprep.subr.bf16.mxu0 0
  %1382 = vmatpush1.bf16.msra.mxu0 %v1359
  %1383 = vmatprep.subr.bf16.mxu0 0
  %1384 = vmatpush2.bf16.msra.mxu0 0
  %1385 = vmatprep.subr.bf16.mxu0 0
  %1386 = vmatpush2.bf16.msra.mxu0 0
  %1387 = vmatprep.subr.bf16.mxu0 0
  %1388 = vmatpush2.bf16.msra.mxu0 0
  %1389 = vmatprep.subr.bf16.mxu0 0
  %1390 = vmatpush2.bf16.msra.mxu0 0
  %1391 = vmatprep.subr.bf16.mxu0 0
  %1392 = vmatpush2.bf16.msra.mxu0 0
  %1393 = vmatprep.subr.bf16.mxu0 0
  %1394 = vmatpush2.bf16.msra.mxu0 0
  %1395 = vmatprep.subr.bf16.mxu0 0
  %1396 = vmatpush2.bf16.msra.mxu0 0
  %1397 = vmatprep.subr.bf16.mxu0 0
  %1398 = vmatpush2.bf16.msra.mxu0 0
  %1399 = vmatprep.mubr.bf16.mxu0 0
  %1400 = vmatmul.mubr.bf16.gmra.mxu0 %v578
  %v1401 = vpop.f32.mrf.mxu0
  %v1402 = vadd.f32 0.0, %v1401
  %v1403 = vpop.f32.mrf.mxu0
  %v1404 = vpop.f32.mrf.mxu0
  %v1405 = vadd.f32 0.0, %v1404
  %v1406 = vpop.f32.mrf.mxu0
  %1407 = vmatprep.mubr.bf16.mxu0 0
  %1408 = vmatmul.mubr.bf16.gmra.mxu0 %v579
  %v1409 = vpop.f32.mrf.mxu0
  %v1410 = vadd.f32 0.0, %v1409
  %v1411 = vpop.f32.mrf.mxu0
  %v1412 = vpop.f32.mrf.mxu0
  %v1413 = vadd.f32 0.0, %v1412
  %v1414 = vpop.f32.mrf.mxu0
  %1415 = vmatprep.mubr.bf16.mxu0 0
  %1416 = vmatmul.mubr.bf16.gmra.mxu0 %v580
  %v1417 = vpop.f32.mrf.mxu0
  %v1418 = vadd.f32 0.0, %v1417
  %v1419 = vpop.f32.mrf.mxu0
  %v1420 = vpop.f32.mrf.mxu0
  %v1421 = vadd.f32 0.0, %v1420
  %v1422 = vpop.f32.mrf.mxu0
  %1423 = vmatprep.mubr.bf16.mxu0 0
  %1424 = vmatmul.mubr.bf16.gmra.mxu0 %v581
  %v1425 = vpop.f32.mrf.mxu0
  %v1426 = vadd.f32 0.0, %v1425
  %v1427 = vpop.f32.mrf.mxu0
  %v1428 = vpop.f32.mrf.mxu0
  %v1429 = vadd.f32 0.0, %v1428
  %v1430 = vpop.f32.mrf.mxu0
  %1431 = vmatprep.mubr.bf16.mxu0 0
  %1432 = vmatmul.mubr.bf16.gmra.mxu0 %v582
  %v1433 = vpop.f32.mrf.mxu0
  %v1434 = vadd.f32 0.0, %v1433
  %v1435 = vpop.f32.mrf.mxu0
  %v1436 = vpop.f32.mrf.mxu0
  %v1437 = vadd.f32 0.0, %v1436
  %v1438 = vpop.f32.mrf.mxu0
  %1439 = vmatprep.mubr.bf16.mxu0 0
  %1440 = vmatmul.mubr.bf16.gmra.mxu0 %v583
  %v1441 = vpop.f32.mrf.mxu0
  %v1442 = vadd.f32 0.0, %v1441
  %v1443 = vpop.f32.mrf.mxu0
  %v1444 = vpop.f32.mrf.mxu0
  %v1445 = vadd.f32 0.0, %v1444
  %v1446 = vpop.f32.mrf.mxu0
  %1447 = vmatprep.mubr.bf16.mxu0 0
  %1448 = vmatmul.mubr.bf16.gmra.mxu0 %v584
  %v1449 = vpop.f32.mrf.mxu0
  %v1450 = vadd.f32 0.0, %v1449
  %v1451 = vpop.f32.mrf.mxu0
  %v1452 = vpop.f32.mrf.mxu0
  %v1453 = vadd.f32 0.0, %v1452
  %v1454 = vpop.f32.mrf.mxu0
  %1455 = vmatprep.mubr.bf16.mxu0 0
  %1456 = vmatmul.mubr.bf16.gmra.mxu0 %v585
  %v1457 = vpop.f32.mrf.mxu0
  %v1458 = vadd.f32 0.0, %v1457
  %v1459 = vpop.f32.mrf.mxu0
  %v1460 = vpop.f32.mrf.mxu0
  %v1461 = vadd.f32 0.0, %v1460
  %v1462 = vpop.f32.mrf.mxu0
  %1463 = vdwg.mxu0
  %v1464 = vmul.f32 %v1402, %v694
  %v1465 = vmul.f32 %v1405, %v699
  %v1466 = vmul.f32 %v1410, %v704
  %v1467 = vmul.f32 %v1413, %v709
  %v1468 = vmul.f32 %v1418, %v714
  %v1469 = vmul.f32 %v1421, %v719
  %v1470 = vmul.f32 %v1426, %v724
  %v1471 = vmul.f32 %v1429, %v729
  %v1472 = vmul.f32 %v1434, %v734
  %v1473 = vmul.f32 %v1437, %v739
  %v1474 = vmul.f32 %v1442, %v744
  %v1475 = vmul.f32 %v1445, %v749
  %v1476 = vmul.f32 %v1450, %v754
  %v1477 = vmul.f32 %v1453, %v759
  %v1478 = vmul.f32 %v1458, %v764
  %v1479 = vmul.f32 %v1461, %v769
  %v1481 = vlaneseq
  %v1482 = vshrl.u32 %v1481, 7
  %v1483 = vsub.s32 0, %v1482
  %v1484 = vrot.slane %v1084, %v1483
  %v1486 = vadd.f32 %v1464, %v1484
  %v1487 = vadd.f32 %v1465, %v1484
  %v1488 = vadd.f32 %v1466, %v1484
  %v1489 = vadd.f32 %v1467, %v1484
  %v1490 = vadd.f32 %v1468, %v1484
  %v1491 = vadd.f32 %v1469, %v1484
  %v1492 = vadd.f32 %v1470, %v1484
  %v1493 = vadd.f32 %v1471, %v1484
  %v1494 = vadd.f32 %v1472, %v1484
  %v1495 = vadd.f32 %v1473, %v1484
  %v1496 = vadd.f32 %v1474, %v1484
  %v1497 = vadd.f32 %v1475, %v1484
  %v1498 = vadd.f32 %v1476, %v1484
  %v1499 = vadd.f32 %v1477, %v1484
  %v1500 = vadd.f32 %v1478, %v1484
  %v1501 = vadd.f32 %v1479, %v1484
  %v1502 = vadd.f32 %v1486, %v39
  %v1503 = vadd.f32 %v1487, %v40
  %v1504 = vadd.f32 %v1488, %v41
  %v1505 = vadd.f32 %v1489, %v42
  %v1506 = vadd.f32 %v1490, %v43
  %v1507 = vadd.f32 %v1491, %v44
  %v1508 = vadd.f32 %v1492, %v45
  %v1509 = vadd.f32 %v1493, %v46
  %v1510 = vadd.f32 %v1494, %v47
  %v1511 = vadd.f32 %v1495, %v48
  %v1512 = vadd.f32 %v1496, %v49
  %v1513 = vadd.f32 %v1497, %v50
  %v1514 = vadd.f32 %v1498, %v51
  %v1515 = vadd.f32 %v1499, %v52
  %v1516 = vadd.f32 %v1500, %v53
  %v1517 = vadd.f32 %v1501, %v54
  %1518 = vst [vmem:[%s11] sm:$0xff] %v1502
  %1519 = vst [vmem:[%s11 + $0x8] sm:$0xff] %v1503
  %1520 = vst [vmem:[%s11 + $0x10] sm:$0xff] %v1504
  %1521 = vst [vmem:[%s11 + $0x18] sm:$0xff] %v1505
  %1522 = vst [vmem:[%s11 + $0x20] sm:$0xff] %v1506
  %1523 = vst [vmem:[%s11 + $0x28] sm:$0xff] %v1507
  %1524 = vst [vmem:[%s11 + $0x30] sm:$0xff] %v1508
  %1525 = vst [vmem:[%s11 + $0x38] sm:$0xff] %v1509
  %1526 = vst [vmem:[%s11 + $0x40] sm:$0xff] %v1510
  %1527 = vst [vmem:[%s11 + $0x48] sm:$0xff] %v1511
  %1528 = vst [vmem:[%s11 + $0x50] sm:$0xff] %v1512
  %1529 = vst [vmem:[%s11 + $0x58] sm:$0xff] %v1513
  %1530 = vst [vmem:[%s11 + $0x60] sm:$0xff] %v1514
  %1531 = vst [vmem:[%s11 + $0x68] sm:$0xff] %v1515
  %1532 = vst [vmem:[%s11 + $0x70] sm:$0xff] %v1516
  %1533 = vst [vmem:[%s11 + $0x78] sm:$0xff] %v1517
  // Predicated region
  $region46: #{hgnn_forward.1} parent=0 // pred_check
    _
  $region47: #{hgnn_forward.1} parent=0 // pred_check_branch
    %1535 = sbr.rel (0) target = $region49
  $region48: #{hgnn_forward.1} parent=0 // pred_region
    _
  $region49: #{hgnn_forward.1} parent=0 // pred_fallthru
    _
  // Predicated region
  $region50: #{hgnn_forward.1} parent=0 // pred_check
    _
  $region51: #{hgnn_forward.1} parent=0 // pred_check_branch
    %1537 = sbr.rel (0) target = $region53
  $region52: #{hgnn_forward.1} parent=0 // pred_region
    _
  $region53: #{hgnn_forward.1} parent=0 // pred_fallthru
    _

</llo_original>
